<compile_context>
chip_gen: v7x
topology: tpu7x:2x2x1
jax: 0.10.0
libtpu: 0.0.40
codegen_flags: <defaults>
</compile_context>

<pallas_src>
import jax
import jax.numpy as jnp
from jax import lax
from jax.experimental import pallas as pl
from jax.experimental.pallas import tpu as pltpu


_VMEM_SPEC = pl.BlockSpec(memory_space=pltpu.MemorySpace.VMEM)


# ---------------------------------------------------------------------------
# Fused Pallas kernel: LSTM recurrence + Linear -> ReLU -> Linear
# ---------------------------------------------------------------------------

def _fused_net_kernel(x_ref, wih_ref, whh_ref, b_ref, w1_ref, b1_ref,
                      w2_ref, b2_ref, o_ref, hs_sc):
    """Single-invocation fused forward.

    x_ref:   (T, Bp, I)   VMEM  time-major, batch padded to Bp (multiple of 8)
    wih_ref: (I, 4H)      VMEM  (transposed PyTorch weight_ih_l0)
    whh_ref: (H, 4H)      VMEM  (transposed PyTorch weight_hh_l0)
    b_ref:   (1, 4H)      VMEM  (bias_ih_l0 + bias_hh_l0)
    w1_ref:  (H, H)       VMEM  (transposed Linear(32,32) weight)
    b1_ref:  (1, H)       VMEM
    w2_ref:  (H, Op)      VMEM  (transposed Linear(32,8) weight, zero-padded to Op lanes)
    b2_ref:  (1, Op)      VMEM  (zero-padded)
    o_ref:   (T, Bp, Op)  VMEM  lane-dense output slab
    hs_sc:   (T*Bp, H)    VMEM  hidden-state sequence buffer feeding the fused MLP
    Gate order follows PyTorch: i, f, g, o.
    """
    T, Bp, _ = x_ref.shape
    H = whh_ref.shape[0]
    G = 4 * H

    # ---- hoisted, register-resident weights / bias (loaded once) ----------
    wih = wih_ref[...]            # (I, 4H)
    whh = whh_ref[...]            # (H, 4H)
    bias = b_ref[...]             # (1, 4H)

    # ---- batched input projection for ALL timesteps (one MXU matmul) ------
    x2d = x_ref[...].reshape(T * Bp, x_ref.shape[2])                 # (T*Bp, I)
    gx = jnp.dot(x2d, wih, preferred_element_type=jnp.float32) + bias
    gx = gx.reshape(T, Bp, G)     # time-major: gx[t] is a clean full-vreg slice

    # Lane mask selecting the tanh ("g") gate: lanes [2H, 3H). Hoisted (built once).
    lane = lax.broadcasted_iota(jnp.int32, (Bp, G), 1)
    g_mask = (lane >= 2 * H) & (lane < 3 * H)

    h = jnp.zeros((Bp, H), jnp.float32)
    c = jnp.zeros((Bp, H), jnp.float32)

    # ---- recurrence: fully unrolled (T static), h/c carried in vregs ------
    for t in range(T):
        gates = gx[t] + jnp.dot(h, whh, preferred_element_type=jnp.float32)   # (Bp, 4H)
        # Full-width activations on the (Bp,128) gates vreg, masked select:
        acts = jnp.where(g_mask, jnp.tanh(gates), jax.nn.sigmoid(gates))
        i_g = acts[:, 0 * H:1 * H]
        f_g = acts[:, 1 * H:2 * H]
        g_g = acts[:, 2 * H:3 * H]
        o_g = acts[:, 3 * H:4 * H]
        c = f_g * c + i_g * g_g
        h = o_g * jnp.tanh(c)
        hs_sc[pl.ds(t * Bp, Bp), :] = h       # stash hidden state for the fused MLP

    # ---- fused Linear(H,H) -> ReLU -> Linear(H,Op) on the whole sequence --
    hs = hs_sc[...]                                                   # (T*Bp, H)
    z = jnp.dot(hs, w1_ref[...], preferred_element_type=jnp.float32) + b1_ref[...]
    z = jnp.maximum(z, 0.0)
    y = jnp.dot(z, w2_ref[...], preferred_element_type=jnp.float32) + b2_ref[...]
    o_ref[...] = y.reshape(T, Bp, y.shape[-1]).astype(o_ref.dtype)


# ---------------------------------------------------------------------------
# Wrapper (forward pass matching ConfigurableNetwork.forward for this config)
# ---------------------------------------------------------------------------

def configurable_network_forward(x_bti, params):
    """x_bti: (B, T, I) float32. Returns (B, T, O)."""
    B, T, _ = x_bti.shape
    H = params["w_hh"].shape[1]
    O = params["w2"].shape[0]
    Bp = ((B + 7) // 8) * 8          # pad batch to full sublanes
    Op = ((O + 127) // 128) * 128    # pad output to full lanes (lane-dense stores)

    # PermuteLayer #1 ((B,T,I)->(T,B,I)) fused with the sublane padding of the
    # batch into one tiny XLA copy; everything else runs in the Pallas kernel.
    x_p = jnp.pad(x_bti.astype(jnp.float32), ((0, Bp - B), (0, 0), (0, 0)))
    x_tm = jnp.transpose(x_p, (1, 0, 2))                               # (T, Bp, I)

    wih_t = jnp.transpose(params["w_ih"])                              # (I, 4H)
    whh_t = jnp.transpose(params["w_hh"])                              # (H, 4H)
    bias = (params["b_ih"] + params["b_hh"]).reshape(1, 4 * H)         # (1, 4H)
    w1_t = jnp.transpose(params["w1"])                                 # (H, H)
    b1 = params["b1"].reshape(1, H)                                    # (1, H)
    w2_t = jnp.pad(jnp.transpose(params["w2"]), ((0, 0), (0, Op - O))) # (H, Op)
    b2 = jnp.pad(params["b2"].reshape(1, O), ((0, 0), (0, Op - O)))    # (1, Op)

    out_tm = pl.pallas_call(
        _fused_net_kernel,
        out_shape=jax.ShapeDtypeStruct((T, Bp, Op), jnp.float32),
        in_specs=[_VMEM_SPEC] * 8,
        out_specs=_VMEM_SPEC,
        scratch_shapes=[pltpu.VMEM((T * Bp, H), jnp.float32)],
    )(x_tm, wih_t, whh_t, bias, w1_t, b1, w2_t, b2)

    # PermuteLayer #2 + strip batch / output-lane padding: tiny slice+transpose
    # on (T,B,O); fuses into a single small XLA op.
    return jnp.transpose(out_tm[:, :B, :O], (1, 0, 2))


# ---------------------------------------------------------------------------
# Pure-JAX reference (for correctness check)
# ---------------------------------------------------------------------------

def _reference_forward(x_bti, p):
    x = jnp.transpose(x_bti, (1, 0, 2))           # (T,B,I)
    T, B, _ = x.shape
    H = p["w_hh"].shape[1]

    def step(carry, x_t):
        h, c = carry
        gates = x_t @ p["w_ih"].T + h @ p["w_hh"].T + p["b_ih"] + p["b_hh"]
        i_g = jax.nn.sigmoid(gates[:, 0 * H:1 * H])
        f_g = jax.nn.sigmoid(gates[:, 1 * H:2 * H])
        g_g = jnp.tanh(gates[:, 2 * H:3 * H])
        o_g = jax.nn.sigmoid(gates[:, 3 * H:4 * H])
        c = f_g * c + i_g * g_g
        h = o_g * jnp.tanh(c)
        return (h, c), h

    init = (jnp.zeros((B, H), jnp.float32), jnp.zeros((B, H), jnp.float32))
    _, ys = lax.scan(step, init, x)
    x = jnp.transpose(ys, (1, 0, 2))              # (B,T,H)
    x = jnp.maximum(x @ p["w1"].T + p["b1"], 0.0)
    x = x @ p["w2"].T + p["b2"]
    return x


# ---------------------------------------------------------------------------
# Main
# ---------------------------------------------------------------------------

if __name__ == "__main__":
    B, T, I, H, O = 2, 8, 16, 32, 8

    key = jax.random.PRNGKey(0)
    keys = jax.random.split(key, 9)

    def uni(k, shape, fan):
        bound = 1.0 / jnp.sqrt(jnp.float32(fan))
        return jax.random.uniform(k, shape, jnp.float32, -bound, bound)

    params = {
        # nn.LSTM(16, 32) parameters (PyTorch shapes / gate order i,f,g,o)
        "w_ih": uni(keys[0], (4 * H, I), H),
        "w_hh": uni(keys[1], (4 * H, H), H),
        "b_ih": uni(keys[2], (4 * H,), H),
        "b_hh": uni(keys[3], (4 * H,), H),
        # nn.Linear(32, 32)
        "w1": uni(keys[4], (H, H), H),
        "b1": uni(keys[5], (H,), H),
        # nn.Linear(32, 8)
        "w2": uni(keys[6], (O, H), H),
        "b2": uni(keys[7], (O,), H),
    }

    x = jax.random.normal(keys[8], (B, T, I), jnp.float32)

    fwd = jax.jit(configurable_network_forward)
    out = jax.block_until_ready(fwd(x, params))

    ref = jax.block_until_ready(_reference_forward(x, params))
    assert out.shape == (B, T, O), out.shape
    assert jnp.allclose(out, ref, rtol=1e-4, atol=1e-4), float(jnp.max(jnp.abs(out - ref)))

    print("KERNEL_OK")
</pallas_src>

<mosaic_0001>
module attributes {stable_mosaic.version = 11 : i64} {
  func.func @_fused_net_kernel(%arg0: memref<8x8x16xf32, #tpu.memory_space<vmem>>, %arg1: memref<16x128xf32, #tpu.memory_space<vmem>>, %arg2: memref<32x128xf32, #tpu.memory_space<vmem>>, %arg3: memref<1x128xf32, #tpu.memory_space<vmem>>, %arg4: memref<32x32xf32, #tpu.memory_space<vmem>>, %arg5: memref<1x32xf32, #tpu.memory_space<vmem>>, %arg6: memref<32x128xf32, #tpu.memory_space<vmem>>, %arg7: memref<1x128xf32, #tpu.memory_space<vmem>>, %arg8: memref<8x8x128xf32, #tpu.memory_space<vmem>>, %arg9: memref<64x32xf32, #tpu.memory_space<vmem>>) attributes {dimension_semantics = [], scalar_prefetch = 0 : i64, scratch_operands = 1 : i64, tpu.core_type = #tpu.core_type<tc>} {
    %c0 = arith.constant 0 : index
    %c0_0 = arith.constant 0 : index
    %0 = vector.load %arg1[%c0, %c0_0] : memref<16x128xf32, #tpu.memory_space<vmem>>, vector<16x128xf32>
    %c0_1 = arith.constant 0 : index
    %c0_2 = arith.constant 0 : index
    %1 = vector.load %arg2[%c0_1, %c0_2] : memref<32x128xf32, #tpu.memory_space<vmem>>, vector<32x128xf32>
    %c0_3 = arith.constant 0 : index
    %c0_4 = arith.constant 0 : index
    %2 = vector.load %arg3[%c0_3, %c0_4] : memref<1x128xf32, #tpu.memory_space<vmem>>, vector<1x128xf32>
    %c0_5 = arith.constant 0 : index
    %c0_6 = arith.constant 0 : index
    %c0_7 = arith.constant 0 : index
    %3 = vector.load %arg0[%c0_5, %c0_6, %c0_7] : memref<8x8x16xf32, #tpu.memory_space<vmem>>, vector<8x8x16xf32>
    %4 = vector.shape_cast %3 : vector<8x8x16xf32> to vector<64x16xf32>
    %cst = arith.constant dense<0.000000e+00> : vector<64x128xf32>
    %5 = tpu.matmul %4, %0, %cst {dimension_numbers = #tpu.dot_dimension_numbers<[1], [0], [0], [1], [0, 0, 1, 1], [], []>} : vector<64x16xf32>, vector<16x128xf32>, vector<64x128xf32> -> vector<64x128xf32>
    %6 = vector.broadcast %2 : vector<1x128xf32> to vector<64x128xf32>
    %7 = arith.addf %5, %6 : vector<64x128xf32>
    %8 = vector.shape_cast %7 : vector<64x128xf32> to vector<8x8x128xf32>
    %9 = tpu.iota {dimensions = array<i32: 1>} : vector<8x128xi32>
    %c64_i32 = arith.constant 64 : i32
    %10 = vector.broadcast %c64_i32 : i32 to vector<8x128xi32>
    %11 = arith.cmpi sge, %9, %10 : vector<8x128xi32>
    %c96_i32 = arith.constant 96 : i32
    %12 = vector.broadcast %c96_i32 : i32 to vector<8x128xi32>
    %13 = arith.cmpi slt, %9, %12 : vector<8x128xi32>
    %14 = arith.andi %11, %13 : vector<8x128xi1>
    %cst_8 = arith.constant 0.000000e+00 : f32
    %15 = vector.broadcast %cst_8 : f32 to vector<8x32xf32>
    %cst_9 = arith.constant 0.000000e+00 : f32
    %16 = vector.broadcast %cst_9 : f32 to vector<8x32xf32>
    %17 = vector.extract_strided_slice %8 {offsets = [0, 0, 0], sizes = [1, 8, 128], strides = [1, 1, 1]} : vector<8x8x128xf32> to vector<1x8x128xf32>
    %18 = vector.shape_cast %17 : vector<1x8x128xf32> to vector<8x128xf32>
    %cst_10 = arith.constant dense<0.000000e+00> : vector<8x128xf32>
    %19 = tpu.matmul %15, %1, %cst_10 {dimension_numbers = #tpu.dot_dimension_numbers<[1], [0], [0], [1], [0, 0, 1, 1], [], []>} : vector<8x32xf32>, vector<32x128xf32>, vector<8x128xf32> -> vector<8x128xf32>
    %20 = arith.addf %18, %19 : vector<8x128xf32>
    %21 = math.tanh %20 : vector<8x128xf32>
    %22 = arith.negf %20 : vector<8x128xf32>
    %23 = math.exp %22 : vector<8x128xf32>
    %cst_11 = arith.constant 1.000000e+00 : f32
    %24 = vector.broadcast %cst_11 : f32 to vector<8x128xf32>
    %25 = arith.addf %24, %23 : vector<8x128xf32>
    %26 = arith.divf %24, %25 : vector<8x128xf32>
    %27 = arith.select %14, %21, %26 : vector<8x128xi1>, vector<8x128xf32>
    %28 = vector.extract_strided_slice %27 {offsets = [0, 0], sizes = [8, 32], strides = [1, 1]} : vector<8x128xf32> to vector<8x32xf32>
    %29 = vector.extract_strided_slice %27 {offsets = [0, 32], sizes = [8, 32], strides = [1, 1]} : vector<8x128xf32> to vector<8x32xf32>
    %30 = vector.extract_strided_slice %27 {offsets = [0, 64], sizes = [8, 32], strides = [1, 1]} : vector<8x128xf32> to vector<8x32xf32>
    %31 = vector.extract_strided_slice %27 {offsets = [0, 96], sizes = [8, 32], strides = [1, 1]} : vector<8x128xf32> to vector<8x32xf32>
    %32 = arith.mulf %29, %16 : vector<8x32xf32>
    %33 = arith.mulf %28, %30 : vector<8x32xf32>
    %34 = arith.addf %32, %33 : vector<8x32xf32>
    %35 = math.tanh %34 : vector<8x32xf32>
    %36 = arith.mulf %31, %35 : vector<8x32xf32>
    %c0_12 = arith.constant 0 : index
    %c0_13 = arith.constant 0 : index
    %37 = vector.load %arg9[%c0_12, %c0_13] : memref<64x32xf32, #tpu.memory_space<vmem>>, vector<8x32xf32>
    tpu.vector_store %arg9[%c0_12, %c0_13], %36 {strides = array<i32>} : memref<64x32xf32, #tpu.memory_space<vmem>>, vector<8x32xf32>,
    %38 = vector.extract_strided_slice %8 {offsets = [1, 0, 0], sizes = [1, 8, 128], strides = [1, 1, 1]} : vector<8x8x128xf32> to vector<1x8x128xf32>
    %39 = vector.shape_cast %38 : vector<1x8x128xf32> to vector<8x128xf32>
    %cst_14 = arith.constant dense<0.000000e+00> : vector<8x128xf32>
    %40 = tpu.matmul %36, %1, %cst_14 {dimension_numbers = #tpu.dot_dimension_numbers<[1], [0], [0], [1], [0, 0, 1, 1], [], []>} : vector<8x32xf32>, vector<32x128xf32>, vector<8x128xf32> -> vector<8x128xf32>
    %41 = arith.addf %39, %40 : vector<8x128xf32>
    %42 = math.tanh %41 : vector<8x128xf32>
    %43 = arith.negf %41 : vector<8x128xf32>
    %44 = math.exp %43 : vector<8x128xf32>
    %cst_15 = arith.constant 1.000000e+00 : f32
    %45 = vector.broadcast %cst_15 : f32 to vector<8x128xf32>
    %46 = arith.addf %45, %44 : vector<8x128xf32>
    %47 = arith.divf %45, %46 : vector<8x128xf32>
    %48 = arith.select %14, %42, %47 : vector<8x128xi1>, vector<8x128xf32>
    %49 = vector.extract_strided_slice %48 {offsets = [0, 0], sizes = [8, 32], strides = [1, 1]} : vector<8x128xf32> to vector<8x32xf32>
    %50 = vector.extract_strided_slice %48 {offsets = [0, 32], sizes = [8, 32], strides = [1, 1]} : vector<8x128xf32> to vector<8x32xf32>
    %51 = vector.extract_strided_slice %48 {offsets = [0, 64], sizes = [8, 32], strides = [1, 1]} : vector<8x128xf32> to vector<8x32xf32>
    %52 = vector.extract_strided_slice %48 {offsets = [0, 96], sizes = [8, 32], strides = [1, 1]} : vector<8x128xf32> to vector<8x32xf32>
    %53 = arith.mulf %50, %34 : vector<8x32xf32>
    %54 = arith.mulf %49, %51 : vector<8x32xf32>
    %55 = arith.addf %53, %54 : vector<8x32xf32>
    %56 = math.tanh %55 : vector<8x32xf32>
    %57 = arith.mulf %52, %56 : vector<8x32xf32>
    %c8 = arith.constant 8 : index
    %c0_16 = arith.constant 0 : index
    %58 = vector.load %arg9[%c8, %c0_16] : memref<64x32xf32, #tpu.memory_space<vmem>>, vector<8x32xf32>
    tpu.vector_store %arg9[%c8, %c0_16], %57 {strides = array<i32>} : memref<64x32xf32, #tpu.memory_space<vmem>>, vector<8x32xf32>,
    %59 = vector.extract_strided_slice %8 {offsets = [2, 0, 0], sizes = [1, 8, 128], strides = [1, 1, 1]} : vector<8x8x128xf32> to vector<1x8x128xf32>
    %60 = vector.shape_cast %59 : vector<1x8x128xf32> to vector<8x128xf32>
    %cst_17 = arith.constant dense<0.000000e+00> : vector<8x128xf32>
    %61 = tpu.matmul %57, %1, %cst_17 {dimension_numbers = #tpu.dot_dimension_numbers<[1], [0], [0], [1], [0, 0, 1, 1], [], []>} : vector<8x32xf32>, vector<32x128xf32>, vector<8x128xf32> -> vector<8x128xf32>
    %62 = arith.addf %60, %61 : vector<8x128xf32>
    %63 = math.tanh %62 : vector<8x128xf32>
    %64 = arith.negf %62 : vector<8x128xf32>
    %65 = math.exp %64 : vector<8x128xf32>
    %cst_18 = arith.constant 1.000000e+00 : f32
    %66 = vector.broadcast %cst_18 : f32 to vector<8x128xf32>
    %67 = arith.addf %66, %65 : vector<8x128xf32>
    %68 = arith.divf %66, %67 : vector<8x128xf32>
    %69 = arith.select %14, %63, %68 : vector<8x128xi1>, vector<8x128xf32>
    %70 = vector.extract_strided_slice %69 {offsets = [0, 0], sizes = [8, 32], strides = [1, 1]} : vector<8x128xf32> to vector<8x32xf32>
    %71 = vector.extract_strided_slice %69 {offsets = [0, 32], sizes = [8, 32], strides = [1, 1]} : vector<8x128xf32> to vector<8x32xf32>
    %72 = vector.extract_strided_slice %69 {offsets = [0, 64], sizes = [8, 32], strides = [1, 1]} : vector<8x128xf32> to vector<8x32xf32>
    %73 = vector.extract_strided_slice %69 {offsets = [0, 96], sizes = [8, 32], strides = [1, 1]} : vector<8x128xf32> to vector<8x32xf32>
    %74 = arith.mulf %71, %55 : vector<8x32xf32>
    %75 = arith.mulf %70, %72 : vector<8x32xf32>
    %76 = arith.addf %74, %75 : vector<8x32xf32>
    %77 = math.tanh %76 : vector<8x32xf32>
    %78 = arith.mulf %73, %77 : vector<8x32xf32>
    %c16 = arith.constant 16 : index
    %c0_19 = arith.constant 0 : index
    %79 = vector.load %arg9[%c16, %c0_19] : memref<64x32xf32, #tpu.memory_space<vmem>>, vector<8x32xf32>
    tpu.vector_store %arg9[%c16, %c0_19], %78 {strides = array<i32>} : memref<64x32xf32, #tpu.memory_space<vmem>>, vector<8x32xf32>,
    %80 = vector.extract_strided_slice %8 {offsets = [3, 0, 0], sizes = [1, 8, 128], strides = [1, 1, 1]} : vector<8x8x128xf32> to vector<1x8x128xf32>
    %81 = vector.shape_cast %80 : vector<1x8x128xf32> to vector<8x128xf32>
    %cst_20 = arith.constant dense<0.000000e+00> : vector<8x128xf32>
    %82 = tpu.matmul %78, %1, %cst_20 {dimension_numbers = #tpu.dot_dimension_numbers<[1], [0], [0], [1], [0, 0, 1, 1], [], []>} : vector<8x32xf32>, vector<32x128xf32>, vector<8x128xf32> -> vector<8x128xf32>
    %83 = arith.addf %81, %82 : vector<8x128xf32>
    %84 = math.tanh %83 : vector<8x128xf32>
    %85 = arith.negf %83 : vector<8x128xf32>
    %86 = math.exp %85 : vector<8x128xf32>
    %cst_21 = arith.constant 1.000000e+00 : f32
    %87 = vector.broadcast %cst_21 : f32 to vector<8x128xf32>
    %88 = arith.addf %87, %86 : vector<8x128xf32>
    %89 = arith.divf %87, %88 : vector<8x128xf32>
    %90 = arith.select %14, %84, %89 : vector<8x128xi1>, vector<8x128xf32>
    %91 = vector.extract_strided_slice %90 {offsets = [0, 0], sizes = [8, 32], strides = [1, 1]} : vector<8x128xf32> to vector<8x32xf32>
    %92 = vector.extract_strided_slice %90 {offsets = [0, 32], sizes = [8, 32], strides = [1, 1]} : vector<8x128xf32> to vector<8x32xf32>
    %93 = vector.extract_strided_slice %90 {offsets = [0, 64], sizes = [8, 32], strides = [1, 1]} : vector<8x128xf32> to vector<8x32xf32>
    %94 = vector.extract_strided_slice %90 {offsets = [0, 96], sizes = [8, 32], strides = [1, 1]} : vector<8x128xf32> to vector<8x32xf32>
    %95 = arith.mulf %92, %76 : vector<8x32xf32>
    %96 = arith.mulf %91, %93 : vector<8x32xf32>
    %97 = arith.addf %95, %96 : vector<8x32xf32>
    %98 = math.tanh %97 : vector<8x32xf32>
    %99 = arith.mulf %94, %98 : vector<8x32xf32>
    %c24 = arith.constant 24 : index
    %c0_22 = arith.constant 0 : index
    %100 = vector.load %arg9[%c24, %c0_22] : memref<64x32xf32, #tpu.memory_space<vmem>>, vector<8x32xf32>
    tpu.vector_store %arg9[%c24, %c0_22], %99 {strides = array<i32>} : memref<64x32xf32, #tpu.memory_space<vmem>>, vector<8x32xf32>,
    %101 = vector.extract_strided_slice %8 {offsets = [4, 0, 0], sizes = [1, 8, 128], strides = [1, 1, 1]} : vector<8x8x128xf32> to vector<1x8x128xf32>
    %102 = vector.shape_cast %101 : vector<1x8x128xf32> to vector<8x128xf32>
    %cst_23 = arith.constant dense<0.000000e+00> : vector<8x128xf32>
    %103 = tpu.matmul %99, %1, %cst_23 {dimension_numbers = #tpu.dot_dimension_numbers<[1], [0], [0], [1], [0, 0, 1, 1], [], []>} : vector<8x32xf32>, vector<32x128xf32>, vector<8x128xf32> -> vector<8x128xf32>
    %104 = arith.addf %102, %103 : vector<8x128xf32>
    %105 = math.tanh %104 : vector<8x128xf32>
    %106 = arith.negf %104 : vector<8x128xf32>
    %107 = math.exp %106 : vector<8x128xf32>
    %cst_24 = arith.constant 1.000000e+00 : f32
    %108 = vector.broadcast %cst_24 : f32 to vector<8x128xf32>
    %109 = arith.addf %108, %107 : vector<8x128xf32>
    %110 = arith.divf %108, %109 : vector<8x128xf32>
    %111 = arith.select %14, %105, %110 : vector<8x128xi1>, vector<8x128xf32>
    %112 = vector.extract_strided_slice %111 {offsets = [0, 0], sizes = [8, 32], strides = [1, 1]} : vector<8x128xf32> to vector<8x32xf32>
    %113 = vector.extract_strided_slice %111 {offsets = [0, 32], sizes = [8, 32], strides = [1, 1]} : vector<8x128xf32> to vector<8x32xf32>
    %114 = vector.extract_strided_slice %111 {offsets = [0, 64], sizes = [8, 32], strides = [1, 1]} : vector<8x128xf32> to vector<8x32xf32>
    %115 = vector.extract_strided_slice %111 {offsets = [0, 96], sizes = [8, 32], strides = [1, 1]} : vector<8x128xf32> to vector<8x32xf32>
    %116 = arith.mulf %113, %97 : vector<8x32xf32>
    %117 = arith.mulf %112, %114 : vector<8x32xf32>
    %118 = arith.addf %116, %117 : vector<8x32xf32>
    %119 = math.tanh %118 : vector<8x32xf32>
    %120 = arith.mulf %115, %119 : vector<8x32xf32>
    %c32 = arith.constant 32 : index
    %c0_25 = arith.constant 0 : index
    %121 = vector.load %arg9[%c32, %c0_25] : memref<64x32xf32, #tpu.memory_space<vmem>>, vector<8x32xf32>
    tpu.vector_store %arg9[%c32, %c0_25], %120 {strides = array<i32>} : memref<64x32xf32, #tpu.memory_space<vmem>>, vector<8x32xf32>,
    %122 = vector.extract_strided_slice %8 {offsets = [5, 0, 0], sizes = [1, 8, 128], strides = [1, 1, 1]} : vector<8x8x128xf32> to vector<1x8x128xf32>
    %123 = vector.shape_cast %122 : vector<1x8x128xf32> to vector<8x128xf32>
    %cst_26 = arith.constant dense<0.000000e+00> : vector<8x128xf32>
    %124 = tpu.matmul %120, %1, %cst_26 {dimension_numbers = #tpu.dot_dimension_numbers<[1], [0], [0], [1], [0, 0, 1, 1], [], []>} : vector<8x32xf32>, vector<32x128xf32>, vector<8x128xf32> -> vector<8x128xf32>
    %125 = arith.addf %123, %124 : vector<8x128xf32>
    %126 = math.tanh %125 : vector<8x128xf32>
    %127 = arith.negf %125 : vector<8x128xf32>
    %128 = math.exp %127 : vector<8x128xf32>
    %cst_27 = arith.constant 1.000000e+00 : f32
    %129 = vector.broadcast %cst_27 : f32 to vector<8x128xf32>
    %130 = arith.addf %129, %128 : vector<8x128xf32>
    %131 = arith.divf %129, %130 : vector<8x128xf32>
    %132 = arith.select %14, %126, %131 : vector<8x128xi1>, vector<8x128xf32>
    %133 = vector.extract_strided_slice %132 {offsets = [0, 0], sizes = [8, 32], strides = [1, 1]} : vector<8x128xf32> to vector<8x32xf32>
    %134 = vector.extract_strided_slice %132 {offsets = [0, 32], sizes = [8, 32], strides = [1, 1]} : vector<8x128xf32> to vector<8x32xf32>
    %135 = vector.extract_strided_slice %132 {offsets = [0, 64], sizes = [8, 32], strides = [1, 1]} : vector<8x128xf32> to vector<8x32xf32>
    %136 = vector.extract_strided_slice %132 {offsets = [0, 96], sizes = [8, 32], strides = [1, 1]} : vector<8x128xf32> to vector<8x32xf32>
    %137 = arith.mulf %134, %118 : vector<8x32xf32>
    %138 = arith.mulf %133, %135 : vector<8x32xf32>
    %139 = arith.addf %137, %138 : vector<8x32xf32>
    %140 = math.tanh %139 : vector<8x32xf32>
    %141 = arith.mulf %136, %140 : vector<8x32xf32>
    %c40 = arith.constant 40 : index
    %c0_28 = arith.constant 0 : index
    %142 = vector.load %arg9[%c40, %c0_28] : memref<64x32xf32, #tpu.memory_space<vmem>>, vector<8x32xf32>
    tpu.vector_store %arg9[%c40, %c0_28], %141 {strides = array<i32>} : memref<64x32xf32, #tpu.memory_space<vmem>>, vector<8x32xf32>,
    %143 = vector.extract_strided_slice %8 {offsets = [6, 0, 0], sizes = [1, 8, 128], strides = [1, 1, 1]} : vector<8x8x128xf32> to vector<1x8x128xf32>
    %144 = vector.shape_cast %143 : vector<1x8x128xf32> to vector<8x128xf32>
    %cst_29 = arith.constant dense<0.000000e+00> : vector<8x128xf32>
    %145 = tpu.matmul %141, %1, %cst_29 {dimension_numbers = #tpu.dot_dimension_numbers<[1], [0], [0], [1], [0, 0, 1, 1], [], []>} : vector<8x32xf32>, vector<32x128xf32>, vector<8x128xf32> -> vector<8x128xf32>
    %146 = arith.addf %144, %145 : vector<8x128xf32>
    %147 = math.tanh %146 : vector<8x128xf32>
    %148 = arith.negf %146 : vector<8x128xf32>
    %149 = math.exp %148 : vector<8x128xf32>
    %cst_30 = arith.constant 1.000000e+00 : f32
    %150 = vector.broadcast %cst_30 : f32 to vector<8x128xf32>
    %151 = arith.addf %150, %149 : vector<8x128xf32>
    %152 = arith.divf %150, %151 : vector<8x128xf32>
    %153 = arith.select %14, %147, %152 : vector<8x128xi1>, vector<8x128xf32>
    %154 = vector.extract_strided_slice %153 {offsets = [0, 0], sizes = [8, 32], strides = [1, 1]} : vector<8x128xf32> to vector<8x32xf32>
    %155 = vector.extract_strided_slice %153 {offsets = [0, 32], sizes = [8, 32], strides = [1, 1]} : vector<8x128xf32> to vector<8x32xf32>
    %156 = vector.extract_strided_slice %153 {offsets = [0, 64], sizes = [8, 32], strides = [1, 1]} : vector<8x128xf32> to vector<8x32xf32>
    %157 = vector.extract_strided_slice %153 {offsets = [0, 96], sizes = [8, 32], strides = [1, 1]} : vector<8x128xf32> to vector<8x32xf32>
    %158 = arith.mulf %155, %139 : vector<8x32xf32>
    %159 = arith.mulf %154, %156 : vector<8x32xf32>
    %160 = arith.addf %158, %159 : vector<8x32xf32>
    %161 = math.tanh %160 : vector<8x32xf32>
    %162 = arith.mulf %157, %161 : vector<8x32xf32>
    %c48 = arith.constant 48 : index
    %c0_31 = arith.constant 0 : index
    %163 = vector.load %arg9[%c48, %c0_31] : memref<64x32xf32, #tpu.memory_space<vmem>>, vector<8x32xf32>
    tpu.vector_store %arg9[%c48, %c0_31], %162 {strides = array<i32>} : memref<64x32xf32, #tpu.memory_space<vmem>>, vector<8x32xf32>,
    %164 = vector.extract_strided_slice %8 {offsets = [7, 0, 0], sizes = [1, 8, 128], strides = [1, 1, 1]} : vector<8x8x128xf32> to vector<1x8x128xf32>
    %165 = vector.shape_cast %164 : vector<1x8x128xf32> to vector<8x128xf32>
    %cst_32 = arith.constant dense<0.000000e+00> : vector<8x128xf32>
    %166 = tpu.matmul %162, %1, %cst_32 {dimension_numbers = #tpu.dot_dimension_numbers<[1], [0], [0], [1], [0, 0, 1, 1], [], []>} : vector<8x32xf32>, vector<32x128xf32>, vector<8x128xf32> -> vector<8x128xf32>
    %167 = arith.addf %165, %166 : vector<8x128xf32>
    %168 = math.tanh %167 : vector<8x128xf32>
    %169 = arith.negf %167 : vector<8x128xf32>
    %170 = math.exp %169 : vector<8x128xf32>
    %cst_33 = arith.constant 1.000000e+00 : f32
    %171 = vector.broadcast %cst_33 : f32 to vector<8x128xf32>
    %172 = arith.addf %171, %170 : vector<8x128xf32>
    %173 = arith.divf %171, %172 : vector<8x128xf32>
    %174 = arith.select %14, %168, %173 : vector<8x128xi1>, vector<8x128xf32>
    %175 = vector.extract_strided_slice %174 {offsets = [0, 0], sizes = [8, 32], strides = [1, 1]} : vector<8x128xf32> to vector<8x32xf32>
    %176 = vector.extract_strided_slice %174 {offsets = [0, 32], sizes = [8, 32], strides = [1, 1]} : vector<8x128xf32> to vector<8x32xf32>
    %177 = vector.extract_strided_slice %174 {offsets = [0, 64], sizes = [8, 32], strides = [1, 1]} : vector<8x128xf32> to vector<8x32xf32>
    %178 = vector.extract_strided_slice %174 {offsets = [0, 96], sizes = [8, 32], strides = [1, 1]} : vector<8x128xf32> to vector<8x32xf32>
    %179 = arith.mulf %176, %160 : vector<8x32xf32>
    %180 = arith.mulf %175, %177 : vector<8x32xf32>
    %181 = arith.addf %179, %180 : vector<8x32xf32>
    %182 = math.tanh %181 : vector<8x32xf32>
    %183 = arith.mulf %178, %182 : vector<8x32xf32>
    %c56 = arith.constant 56 : index
    %c0_34 = arith.constant 0 : index
    %184 = vector.load %arg9[%c56, %c0_34] : memref<64x32xf32, #tpu.memory_space<vmem>>, vector<8x32xf32>
    tpu.vector_store %arg9[%c56, %c0_34], %183 {strides = array<i32>} : memref<64x32xf32, #tpu.memory_space<vmem>>, vector<8x32xf32>,
    %c0_35 = arith.constant 0 : index
    %c0_36 = arith.constant 0 : index
    %185 = vector.load %arg9[%c0_35, %c0_36] : memref<64x32xf32, #tpu.memory_space<vmem>>, vector<64x32xf32>
    %c0_37 = arith.constant 0 : index
    %c0_38 = arith.constant 0 : index
    %186 = vector.load %arg4[%c0_37, %c0_38] : memref<32x32xf32, #tpu.memory_space<vmem>>, vector<32x32xf32>
    %cst_39 = arith.constant dense<0.000000e+00> : vector<64x32xf32>
    %187 = tpu.matmul %185, %186, %cst_39 {dimension_numbers = #tpu.dot_dimension_numbers<[1], [0], [0], [1], [0, 0, 1, 1], [], []>} : vector<64x32xf32>, vector<32x32xf32>, vector<64x32xf32> -> vector<64x32xf32>
    %c0_40 = arith.constant 0 : index
    %c0_41 = arith.constant 0 : index
    %188 = vector.load %arg5[%c0_40, %c0_41] : memref<1x32xf32, #tpu.memory_space<vmem>>, vector<1x32xf32>
    %189 = vector.broadcast %188 : vector<1x32xf32> to vector<64x32xf32>
    %190 = arith.addf %187, %189 : vector<64x32xf32>
    %cst_42 = arith.constant 0.000000e+00 : f32
    %191 = vector.broadcast %cst_42 : f32 to vector<64x32xf32>
    %192 = arith.maximumf %190, %191 : vector<64x32xf32>
    %c0_43 = arith.constant 0 : index
    %c0_44 = arith.constant 0 : index
    %193 = vector.load %arg6[%c0_43, %c0_44] : memref<32x128xf32, #tpu.memory_space<vmem>>, vector<32x128xf32>
    %cst_45 = arith.constant dense<0.000000e+00> : vector<64x128xf32>
    %194 = tpu.matmul %192, %193, %cst_45 {dimension_numbers = #tpu.dot_dimension_numbers<[1], [0], [0], [1], [0, 0, 1, 1], [], []>} : vector<64x32xf32>, vector<32x128xf32>, vector<64x128xf32> -> vector<64x128xf32>
    %c0_46 = arith.constant 0 : index
    %c0_47 = arith.constant 0 : index
    %195 = vector.load %arg7[%c0_46, %c0_47] : memref<1x128xf32, #tpu.memory_space<vmem>>, vector<1x128xf32>
    %196 = vector.broadcast %195 : vector<1x128xf32> to vector<64x128xf32>
    %197 = arith.addf %194, %196 : vector<64x128xf32>
    %198 = vector.shape_cast %197 : vector<64x128xf32> to vector<8x8x128xf32>
    %c0_48 = arith.constant 0 : index
    %c0_49 = arith.constant 0 : index
    %c0_50 = arith.constant 0 : index
    %199 = vector.load %arg8[%c0_48, %c0_49, %c0_50] : memref<8x8x128xf32, #tpu.memory_space<vmem>>, vector<8x8x128xf32>
    tpu.vector_store %arg8[%c0_48, %c0_49, %c0_50], %198 {strides = array<i32>} : memref<8x8x128xf32, #tpu.memory_space<vmem>>, vector<8x8x128xf32>,
    return
  }
}

</mosaic_0001>

<llo_original>
// kernel: configurable_network_forward.1
$region0: #{configurable_network_forward.1}
  #allocation0 [shape = 'u32[]', space=smem, size = 0x4, offset = 0x4, fixed_abs, tag = 'smem constant byte address 0x4 - core index']
  #allocation1 [shape = 'u32[144,128]{1,0:T(1,128)}', space=vmem, size = 0x12000, scoped, tag = 'internal scratch']
  #allocation2 [shape = 'f32[64,32]{1,0:T(8,128)}', space=vmem, size = 0x8000, scoped, tag = 'scratch operand']
  %s0 = inlined_call_operand.vmem [shape: f32[8,8,16], index: 0, kind: input, shape index: {}]
  %s1 = inlined_call_operand.vmem [shape: f32[16,128], index: 1, kind: input, shape index: {}]
  %s2 = inlined_call_operand.vmem [shape: f32[32,128], index: 2, kind: input, shape index: {}]
  %s3 = inlined_call_operand.vmem [shape: f32[1,128], index: 3, kind: input, shape index: {}]
  %s4 = inlined_call_operand.vmem [shape: f32[32,32], index: 4, kind: input, shape index: {}]
  %s5 = inlined_call_operand.vmem [shape: f32[1,32], index: 5, kind: input, shape index: {}]
  %s6 = inlined_call_operand.vmem [shape: f32[32,128], index: 6, kind: input, shape index: {}]
  %s7 = inlined_call_operand.vmem [shape: f32[1,128], index: 7, kind: input, shape index: {}]
  %s8 = inlined_call_operand.vmem [shape: f32[8,8,128], index: 8, kind: output, shape index: {}]
  %s9 = sld [smem:[#allocation0]]
  $region42: #{configurable_network_forward.1} parent=0
    _
  %s11 = ssub.s32 1, %s9
  %s12 = scalar_select 0, %s11, %s9
  // Predicated region
  $region2: #{configurable_network_forward.1} parent=0 // pred_check
    _
  $region3: #{configurable_network_forward.1} parent=0 // pred_check_branch
    %14 = sbr.rel (0) target = $region5
  $region4: #{configurable_network_forward.1} parent=0 // pred_region
    _
  $region5: #{configurable_network_forward.1} parent=0 // pred_fallthru
    _
  // Predicated region
  $region6: #{configurable_network_forward.1} parent=0 // pred_check
    _
  $region7: #{configurable_network_forward.1} parent=0 // pred_check_branch
    %16 = sbr.rel (0) target = $region9
  $region8: #{configurable_network_forward.1} parent=0 // pred_region
    _
  $region9: #{configurable_network_forward.1} parent=0 // pred_fallthru
    _
  // Predicated region
  $region10: #{configurable_network_forward.1} parent=0 // pred_check
    _
  $region11: #{configurable_network_forward.1} parent=0 // pred_check_branch
    %18 = sbr.rel (0) target = $region13
  $region12: #{configurable_network_forward.1} parent=0 // pred_region
    _
  $region13: #{configurable_network_forward.1} parent=0 // pred_fallthru
    _
  // Predicated region
  $region14: #{configurable_network_forward.1} parent=0 // pred_check
    _
  $region15: #{configurable_network_forward.1} parent=0 // pred_check_branch
    %20 = sbr.rel (0) target = $region17
  $region16: #{configurable_network_forward.1} parent=0 // pred_region
    _
  $region17: #{configurable_network_forward.1} parent=0 // pred_fallthru
    _
  // Predicated region
  $region18: #{configurable_network_forward.1} parent=0 // pred_check
    _
  $region19: #{configurable_network_forward.1} parent=0 // pred_check_branch
    %22 = sbr.rel (0) target = $region21
  $region20: #{configurable_network_forward.1} parent=0 // pred_region
    _
  $region21: #{configurable_network_forward.1} parent=0 // pred_fallthru
    _
  // Predicated region
  $region22: #{configurable_network_forward.1} parent=0 // pred_check
    _
  $region23: #{configurable_network_forward.1} parent=0 // pred_check_branch
    %24 = sbr.rel (0) target = $region25
  $region24: #{configurable_network_forward.1} parent=0 // pred_region
    _
  $region25: #{configurable_network_forward.1} parent=0 // pred_fallthru
    _
  // Predicated region
  $region26: #{configurable_network_forward.1} parent=0 // pred_check
    _
  $region27: #{configurable_network_forward.1} parent=0 // pred_check_branch
    %26 = sbr.rel (0) target = $region29
  $region28: #{configurable_network_forward.1} parent=0 // pred_region
    _
  $region29: #{configurable_network_forward.1} parent=0 // pred_fallthru
    _
  // Predicated region
  $region30: #{configurable_network_forward.1} parent=0 // pred_check
    _
  $region31: #{configurable_network_forward.1} parent=0 // pred_check_branch
    %28 = sbr.rel (0) target = $region33
  $region32: #{configurable_network_forward.1} parent=0 // pred_region
    _
  $region33: #{configurable_network_forward.1} parent=0 // pred_fallthru
    _
  %v29 = vld [vmem:[%s1] sm:$0xff]
  %v30 = vld [vmem:[%s1 + $0x8] sm:$0xff]
  %v31 = vld [vmem:[%s2] sm:$0xff]
  %v32 = vld [vmem:[%s2 + $0x8] sm:$0xff]
  %v33 = vld [vmem:[%s2 + $0x10] sm:$0xff]
  %v34 = vld [vmem:[%s2 + $0x18] sm:$0xff]
  %v35 = vld [vmem:[%s3] sm:$0x1]
  %v36 = vld [vmem:[%s0] sm:$0xff]
  %v37 = vld [vmem:[%s0 + $0x8] sm:$0xff]
  %v38 = vld [vmem:[%s0 + $0x10] sm:$0xff]
  %v39 = vld [vmem:[%s0 + $0x18] sm:$0xff]
  %v40 = vld [vmem:[%s0 + $0x20] sm:$0xff]
  %v41 = vld [vmem:[%s0 + $0x28] sm:$0xff]
  %v42 = vld [vmem:[%s0 + $0x30] sm:$0xff]
  %v43 = vld [vmem:[%s0 + $0x38] sm:$0xff]
  %v45 = vlaneseq
  %v46 = vshrl.u32 %v45, 7
  %v47 = vsub.s32 0, %v46
  %v48 = vrot.slane %v35, %v47
  %vm50 = vcmask 130048
  %v52 = vsel %vm50, %v36, 0
  %v55 = vsel %vm50, %v37, 0
  %v58 = vsel %vm50, %v38, 0
  %v61 = vsel %vm50, %v39, 0
  %v64 = vsel %vm50, %v40, 0
  %v67 = vsel %vm50, %v41, 0
  %v70 = vsel %vm50, %v42, 0
  %v73 = vsel %vm50, %v43, 0
  %75 = vmatprep.subr.mxu0 0.0
  %76 = vmatpush1.msra.mxu0 %v29
  %77 = vmatprep.subr.mxu0 0.0
  %78 = vmatpush1.msra.mxu0 %v30
  %79 = vmatprep.subr.mxu0 0.0
  %80 = vmatpush1.msra.mxu0 0.0
  %81 = vmatprep.subr.mxu0 0.0
  %82 = vmatpush1.msra.mxu0 0.0
  %83 = vmatprep.subr.mxu0 0.0
  %84 = vmatpush1.msra.mxu0 0.0
  %85 = vmatprep.subr.mxu0 0.0
  %86 = vmatpush1.msra.mxu0 0.0
  %87 = vmatprep.subr.mxu0 0.0
  %88 = vmatpush1.msra.mxu0 0.0
  %89 = vmatprep.subr.mxu0 0.0
  %90 = vmatpush1.msra.mxu0 0.0
  %91 = vmatprep.subr.mxu0 0.0
  %92 = vmatpush1.msra.mxu0 0.0
  %93 = vmatprep.subr.mxu0 0.0
  %94 = vmatpush1.msra.mxu0 0.0
  %95 = vmatprep.subr.mxu0 0.0
  %96 = vmatpush1.msra.mxu0 0.0
  %97 = vmatprep.subr.mxu0 0.0
  %98 = vmatpush1.msra.mxu0 0.0
  %99 = vmatprep.subr.mxu0 0.0
  %100 = vmatpush1.msra.mxu0 0.0
  %101 = vmatprep.subr.mxu0 0.0
  %102 = vmatpush1.msra.mxu0 0.0
  %103 = vmatprep.subr.mxu0 0.0
  %104 = vmatpush1.msra.mxu0 0.0
  %105 = vmatprep.subr.mxu0 0.0
  %106 = vmatpush1.msra.mxu0 0.0
  %107 = vmatprep.subr.mxu0 0.0
  %108 = vmatpush1.msra.mxu0 0.0
  %109 = vmatprep.subr.mxu0 0.0
  %110 = vmatpush1.msra.mxu0 0.0
  %111 = vmatprep.subr.mxu0 0.0
  %112 = vmatpush1.msra.mxu0 0.0
  %113 = vmatprep.subr.mxu0 0.0
  %114 = vmatpush1.msra.mxu0 0.0
  %115 = vmatprep.subr.mxu0 0.0
  %116 = vmatpush1.msra.mxu0 0.0
  %117 = vmatprep.subr.mxu0 0.0
  %118 = vmatpush1.msra.mxu0 0.0
  %119 = vmatprep.subr.mxu0 0.0
  %120 = vmatpush1.msra.mxu0 0.0
  %121 = vmatprep.subr.mxu0 0.0
  %122 = vmatpush1.msra.mxu0 0.0
  %123 = vmatprep.subr.mxu0 0.0
  %124 = vmatpush1.msra.mxu0 0.0
  %125 = vmatprep.subr.mxu0 0.0
  %126 = vmatpush1.msra.mxu0 0.0
  %127 = vmatprep.subr.mxu0 0.0
  %128 = vmatpush1.msra.mxu0 0.0
  %129 = vmatprep.subr.mxu0 0.0
  %130 = vmatpush1.msra.mxu0 0.0
  %131 = vmatprep.subr.mxu0 0.0
  %132 = vmatpush1.msra.mxu0 0.0
  %133 = vmatprep.subr.mxu0 0.0
  %134 = vmatpush1.msra.mxu0 0.0
  %135 = vmatprep.subr.mxu0 0.0
  %136 = vmatpush1.msra.mxu0 0.0
  %137 = vmatprep.subr.mxu0 0.0
  %138 = vmatpush1.msra.mxu0 0.0
  %139 = vmatprep.mubr.f32.mxu0 0.0
  %140 = vmatmul.mubr.f32.gmra.mrb[0].mxu0 %v52
  %v141 = vpop.f32.mrb[0].mxu0
  %v142 = vadd.f32 %v48, %v141
  %v143 = vpop.f32.mrb[0].mxu0
  %144 = vmatprep.mubr.f32.mxu0 0.0
  %145 = vmatmul.mubr.f32.gmra.mrb[0].mxu0 %v55
  %v146 = vpop.f32.mrb[0].mxu0
  %v147 = vadd.f32 %v48, %v146
  %v148 = vpop.f32.mrb[0].mxu0
  %149 = vmatprep.mubr.f32.mxu0 0.0
  %150 = vmatmul.mubr.f32.gmra.mrb[0].mxu0 %v58
  %v151 = vpop.f32.mrb[0].mxu0
  %v152 = vadd.f32 %v48, %v151
  %v153 = vpop.f32.mrb[0].mxu0
  %154 = vmatprep.mubr.f32.mxu0 0.0
  %155 = vmatmul.mubr.f32.gmra.mrb[0].mxu0 %v61
  %v156 = vpop.f32.mrb[0].mxu0
  %v157 = vadd.f32 %v48, %v156
  %v158 = vpop.f32.mrb[0].mxu0
  %159 = vmatprep.mubr.f32.mxu0 0.0
  %160 = vmatmul.mubr.f32.gmra.mrb[0].mxu0 %v64
  %v161 = vpop.f32.mrb[0].mxu0
  %v162 = vadd.f32 %v48, %v161
  %v163 = vpop.f32.mrb[0].mxu0
  %164 = vmatprep.mubr.f32.mxu0 0.0
  %165 = vmatmul.mubr.f32.gmra.mrb[0].mxu0 %v67
  %v166 = vpop.f32.mrb[0].mxu0
  %v167 = vadd.f32 %v48, %v166
  %v168 = vpop.f32.mrb[0].mxu0
  %169 = vmatprep.mubr.f32.mxu0 0.0
  %170 = vmatmul.mubr.f32.gmra.mrb[0].mxu0 %v70
  %v171 = vpop.f32.mrb[0].mxu0
  %v172 = vadd.f32 %v48, %v171
  %v173 = vpop.f32.mrb[0].mxu0
  %174 = vmatprep.mubr.f32.mxu0 0.0
  %175 = vmatmul.mubr.f32.gmra.mrb[0].mxu0 %v73
  %v176 = vpop.f32.mrb[0].mxu0
  %v177 = vadd.f32 %v48, %v176
  %v178 = vpop.f32.mrb[0].mxu0
  %179 = vdwg.mxu0
  %v180 = vlaneseq
  %v181 = vand.u32 %v180, 127
  %vm182 = vcmp.ge.s32.totalorder %v181, 64
  %vm183 = vcmp.lt.s32.totalorder %v181, 96
  %vm184 = vmand %vm182, %vm183
  %vm185 = vcmask 261120
  %v187 = vsel %vm185, 0.0, 0
  %189 = vmatprep.subr.mxu0 0.0
  %190 = vmatpush1.msra.mxu0 %v31
  %191 = vmatprep.subr.mxu0 0.0
  %192 = vmatpush1.msra.mxu0 %v32
  %193 = vmatprep.subr.mxu0 0.0
  %194 = vmatpush1.msra.mxu0 %v33
  %195 = vmatprep.subr.mxu0 0.0
  %196 = vmatpush1.msra.mxu0 %v34
  %197 = vmatprep.subr.mxu0 0.0
  %198 = vmatpush1.msra.mxu0 0.0
  %199 = vmatprep.subr.mxu0 0.0
  %200 = vmatpush1.msra.mxu0 0.0
  %201 = vmatprep.subr.mxu0 0.0
  %202 = vmatpush1.msra.mxu0 0.0
  %203 = vmatprep.subr.mxu0 0.0
  %204 = vmatpush1.msra.mxu0 0.0
  %205 = vmatprep.subr.mxu0 0.0
  %206 = vmatpush1.msra.mxu0 0.0
  %207 = vmatprep.subr.mxu0 0.0
  %208 = vmatpush1.msra.mxu0 0.0
  %209 = vmatprep.subr.mxu0 0.0
  %210 = vmatpush1.msra.mxu0 0.0
  %211 = vmatprep.subr.mxu0 0.0
  %212 = vmatpush1.msra.mxu0 0.0
  %213 = vmatprep.subr.mxu0 0.0
  %214 = vmatpush1.msra.mxu0 0.0
  %215 = vmatprep.subr.mxu0 0.0
  %216 = vmatpush1.msra.mxu0 0.0
  %217 = vmatprep.subr.mxu0 0.0
  %218 = vmatpush1.msra.mxu0 0.0
  %219 = vmatprep.subr.mxu0 0.0
  %220 = vmatpush1.msra.mxu0 0.0
  %221 = vmatprep.subr.mxu0 0.0
  %222 = vmatpush1.msra.mxu0 0.0
  %223 = vmatprep.subr.mxu0 0.0
  %224 = vmatpush1.msra.mxu0 0.0
  %225 = vmatprep.subr.mxu0 0.0
  %226 = vmatpush1.msra.mxu0 0.0
  %227 = vmatprep.subr.mxu0 0.0
  %228 = vmatpush1.msra.mxu0 0.0
  %229 = vmatprep.subr.mxu0 0.0
  %230 = vmatpush1.msra.mxu0 0.0
  %231 = vmatprep.subr.mxu0 0.0
  %232 = vmatpush1.msra.mxu0 0.0
  %233 = vmatprep.subr.mxu0 0.0
  %234 = vmatpush1.msra.mxu0 0.0
  %235 = vmatprep.subr.mxu0 0.0
  %236 = vmatpush1.msra.mxu0 0.0
  %237 = vmatprep.subr.mxu0 0.0
  %238 = vmatpush1.msra.mxu0 0.0
  %239 = vmatprep.subr.mxu0 0.0
  %240 = vmatpush1.msra.mxu0 0.0
  %241 = vmatprep.subr.mxu0 0.0
  %242 = vmatpush1.msra.mxu0 0.0
  %243 = vmatprep.subr.mxu0 0.0
  %244 = vmatpush1.msra.mxu0 0.0
  %245 = vmatprep.subr.mxu0 0.0
  %246 = vmatpush1.msra.mxu0 0.0
  %247 = vmatprep.subr.mxu0 0.0
  %248 = vmatpush1.msra.mxu0 0.0
  %249 = vmatprep.subr.mxu0 0.0
  %250 = vmatpush1.msra.mxu0 0.0
  %251 = vmatprep.subr.mxu0 0.0
  %252 = vmatpush1.msra.mxu0 0.0
  %253 = vmatprep.mubr.f32.mxu0 0.0
  %254 = vmatmul.mubr.f32.gmra.mrb[0].mxu0 %v187
  %v255 = vpop.f32.mrb[0].mxu0
  %v256 = vadd.f32 0.0, %v255
  %v257 = vpop.f32.mrb[0].mxu0
  %258 = vdwg.mxu0
  %v259 = vadd.f32 %v142, %v256
  %v260 = vtanh.pop %v259
  %v261 = vxor.u32 %v259, 2147483648
  %v262 = vmul.f32 %v261, 1.442695
  %v263 = vpow.pop %v262
  %v264 = vadd.f32 %v263, 1.0
  %v265 = vrcp.pop %v264
  %v266 = vmul.f32 1.0, %v265
  %v267 = vsel %vm184, %v260, %v266
  %v268 = vmul.f32 %v267, 0.0
  %270 = vrot.lane.b32.xlu0 %v267, 64
  %v271 = vpop.permute.xlu0 %270
  %v273 = vmul.f32 %v267, %v271
  %275 = vrot.lane.b32.xlu0 %v273, 32
  %v276 = vpop.permute.xlu0 %275
  %v278 = vadd.f32 %v268, %v276
  %v279 = vtanh.pop %v278
  %281 = vrot.lane.b32.xlu0 %v279, 64
  %v282 = vpop.permute.xlu0 %281
  %v284 = vmul.f32 %v267, %v282
  %286 = vrot.lane.b32.xlu0 %v284, 32
  %v287 = vpop.permute.xlu0 %286
  %289 = vst.msk [vmem:[#allocation2] sm:$0xff] %vm185, %v287
  %v290 = vsel %vm185, %v287, 0
  %292 = vmatprep.subr.mxu0 0.0
  %293 = vmatpush1.msra.mxu0 %v31
  %294 = vmatprep.subr.mxu0 0.0
  %295 = vmatpush1.msra.mxu0 %v32
  %296 = vmatprep.subr.mxu0 0.0
  %297 = vmatpush1.msra.mxu0 %v33
  %298 = vmatprep.subr.mxu0 0.0
  %299 = vmatpush1.msra.mxu0 %v34
  %300 = vmatprep.subr.mxu0 0.0
  %301 = vmatpush1.msra.mxu0 0.0
  %302 = vmatprep.subr.mxu0 0.0
  %303 = vmatpush1.msra.mxu0 0.0
  %304 = vmatprep.subr.mxu0 0.0
  %305 = vmatpush1.msra.mxu0 0.0
  %306 = vmatprep.subr.mxu0 0.0
  %307 = vmatpush1.msra.mxu0 0.0
  %308 = vmatprep.subr.mxu0 0.0
  %309 = vmatpush1.msra.mxu0 0.0
  %310 = vmatprep.subr.mxu0 0.0
  %311 = vmatpush1.msra.mxu0 0.0
  %312 = vmatprep.subr.mxu0 0.0
  %313 = vmatpush1.msra.mxu0 0.0
  %314 = vmatprep.subr.mxu0 0.0
  %315 = vmatpush1.msra.mxu0 0.0
  %316 = vmatprep.subr.mxu0 0.0
  %317 = vmatpush1.msra.mxu0 0.0
  %318 = vmatprep.subr.mxu0 0.0
  %319 = vmatpush1.msra.mxu0 0.0
  %320 = vmatprep.subr.mxu0 0.0
  %321 = vmatpush1.msra.mxu0 0.0
  %322 = vmatprep.subr.mxu0 0.0
  %323 = vmatpush1.msra.mxu0 0.0
  %324 = vmatprep.subr.mxu0 0.0
  %325 = vmatpush1.msra.mxu0 0.0
  %326 = vmatprep.subr.mxu0 0.0
  %327 = vmatpush1.msra.mxu0 0.0
  %328 = vmatprep.subr.mxu0 0.0
  %329 = vmatpush1.msra.mxu0 0.0
  %330 = vmatprep.subr.mxu0 0.0
  %331 = vmatpush1.msra.mxu0 0.0
  %332 = vmatprep.subr.mxu0 0.0
  %333 = vmatpush1.msra.mxu0 0.0
  %334 = vmatprep.subr.mxu0 0.0
  %335 = vmatpush1.msra.mxu0 0.0
  %336 = vmatprep.subr.mxu0 0.0
  %337 = vmatpush1.msra.mxu0 0.0
  %338 = vmatprep.subr.mxu0 0.0
  %339 = vmatpush1.msra.mxu0 0.0
  %340 = vmatprep.subr.mxu0 0.0
  %341 = vmatpush1.msra.mxu0 0.0
  %342 = vmatprep.subr.mxu0 0.0
  %343 = vmatpush1.msra.mxu0 0.0
  %344 = vmatprep.subr.mxu0 0.0
  %345 = vmatpush1.msra.mxu0 0.0
  %346 = vmatprep.subr.mxu0 0.0
  %347 = vmatpush1.msra.mxu0 0.0
  %348 = vmatprep.subr.mxu0 0.0
  %349 = vmatpush1.msra.mxu0 0.0
  %350 = vmatprep.subr.mxu0 0.0
  %351 = vmatpush1.msra.mxu0 0.0
  %352 = vmatprep.subr.mxu0 0.0
  %353 = vmatpush1.msra.mxu0 0.0
  %354 = vmatprep.subr.mxu0 0.0
  %355 = vmatpush1.msra.mxu0 0.0
  %356 = vmatprep.mubr.f32.mxu0 0.0
  %357 = vmatmul.mubr.f32.gmra.mrb[0].mxu0 %v290
  %v358 = vpop.f32.mrb[0].mxu0
  %v359 = vadd.f32 0.0, %v358
  %v360 = vpop.f32.mrb[0].mxu0
  %361 = vdwg.mxu0
  %v362 = vadd.f32 %v147, %v359
  %v363 = vtanh.pop %v362
  %v364 = vxor.u32 %v362, 2147483648
  %v365 = vmul.f32 %v364, 1.442695
  %v366 = vpow.pop %v365
  %v367 = vadd.f32 %v366, 1.0
  %v368 = vrcp.pop %v367
  %v369 = vmul.f32 1.0, %v368
  %v370 = vsel %vm184, %v363, %v369
  %v371 = vmul.f32 %v370, %v278
  %373 = vrot.lane.b32.xlu0 %v370, 64
  %v374 = vpop.permute.xlu0 %373
  %v376 = vmul.f32 %v370, %v374
  %378 = vrot.lane.b32.xlu0 %v376, 32
  %v379 = vpop.permute.xlu0 %378
  %v381 = vadd.f32 %v371, %v379
  %v382 = vtanh.pop %v381
  %384 = vrot.lane.b32.xlu0 %v382, 64
  %v385 = vpop.permute.xlu0 %384
  %v387 = vmul.f32 %v370, %v385
  %389 = vrot.lane.b32.xlu0 %v387, 32
  %v390 = vpop.permute.xlu0 %389
  %392 = vst.msk [vmem:[#allocation2 + $0x8] sm:$0xff] %vm185, %v390
  %v393 = vsel %vm185, %v390, 0
  %395 = vmatprep.subr.mxu0 0.0
  %396 = vmatpush1.msra.mxu0 %v31
  %397 = vmatprep.subr.mxu0 0.0
  %398 = vmatpush1.msra.mxu0 %v32
  %399 = vmatprep.subr.mxu0 0.0
  %400 = vmatpush1.msra.mxu0 %v33
  %401 = vmatprep.subr.mxu0 0.0
  %402 = vmatpush1.msra.mxu0 %v34
  %403 = vmatprep.subr.mxu0 0.0
  %404 = vmatpush1.msra.mxu0 0.0
  %405 = vmatprep.subr.mxu0 0.0
  %406 = vmatpush1.msra.mxu0 0.0
  %407 = vmatprep.subr.mxu0 0.0
  %408 = vmatpush1.msra.mxu0 0.0
  %409 = vmatprep.subr.mxu0 0.0
  %410 = vmatpush1.msra.mxu0 0.0
  %411 = vmatprep.subr.mxu0 0.0
  %412 = vmatpush1.msra.mxu0 0.0
  %413 = vmatprep.subr.mxu0 0.0
  %414 = vmatpush1.msra.mxu0 0.0
  %415 = vmatprep.subr.mxu0 0.0
  %416 = vmatpush1.msra.mxu0 0.0
  %417 = vmatprep.subr.mxu0 0.0
  %418 = vmatpush1.msra.mxu0 0.0
  %419 = vmatprep.subr.mxu0 0.0
  %420 = vmatpush1.msra.mxu0 0.0
  %421 = vmatprep.subr.mxu0 0.0
  %422 = vmatpush1.msra.mxu0 0.0
  %423 = vmatprep.subr.mxu0 0.0
  %424 = vmatpush1.msra.mxu0 0.0
  %425 = vmatprep.subr.mxu0 0.0
  %426 = vmatpush1.msra.mxu0 0.0
  %427 = vmatprep.subr.mxu0 0.0
  %428 = vmatpush1.msra.mxu0 0.0
  %429 = vmatprep.subr.mxu0 0.0
  %430 = vmatpush1.msra.mxu0 0.0
  %431 = vmatprep.subr.mxu0 0.0
  %432 = vmatpush1.msra.mxu0 0.0
  %433 = vmatprep.subr.mxu0 0.0
  %434 = vmatpush1.msra.mxu0 0.0
  %435 = vmatprep.subr.mxu0 0.0
  %436 = vmatpush1.msra.mxu0 0.0
  %437 = vmatprep.subr.mxu0 0.0
  %438 = vmatpush1.msra.mxu0 0.0
  %439 = vmatprep.subr.mxu0 0.0
  %440 = vmatpush1.msra.mxu0 0.0
  %441 = vmatprep.subr.mxu0 0.0
  %442 = vmatpush1.msra.mxu0 0.0
  %443 = vmatprep.subr.mxu0 0.0
  %444 = vmatpush1.msra.mxu0 0.0
  %445 = vmatprep.subr.mxu0 0.0
  %446 = vmatpush1.msra.mxu0 0.0
  %447 = vmatprep.subr.mxu0 0.0
  %448 = vmatpush1.msra.mxu0 0.0
  %449 = vmatprep.subr.mxu0 0.0
  %450 = vmatpush1.msra.mxu0 0.0
  %451 = vmatprep.subr.mxu0 0.0
  %452 = vmatpush1.msra.mxu0 0.0
  %453 = vmatprep.subr.mxu0 0.0
  %454 = vmatpush1.msra.mxu0 0.0
  %455 = vmatprep.subr.mxu0 0.0
  %456 = vmatpush1.msra.mxu0 0.0
  %457 = vmatprep.subr.mxu0 0.0
  %458 = vmatpush1.msra.mxu0 0.0
  %459 = vmatprep.mubr.f32.mxu0 0.0
  %460 = vmatmul.mubr.f32.gmra.mrb[0].mxu0 %v393
  %v461 = vpop.f32.mrb[0].mxu0
  %v462 = vadd.f32 0.0, %v461
  %v463 = vpop.f32.mrb[0].mxu0
  %464 = vdwg.mxu0
  %v465 = vadd.f32 %v152, %v462
  %v466 = vtanh.pop %v465
  %v467 = vxor.u32 %v465, 2147483648
  %v468 = vmul.f32 %v467, 1.442695
  %v469 = vpow.pop %v468
  %v470 = vadd.f32 %v469, 1.0
  %v471 = vrcp.pop %v470
  %v472 = vmul.f32 1.0, %v471
  %v473 = vsel %vm184, %v466, %v472
  %v474 = vmul.f32 %v473, %v381
  %476 = vrot.lane.b32.xlu0 %v473, 64
  %v477 = vpop.permute.xlu0 %476
  %v479 = vmul.f32 %v473, %v477
  %481 = vrot.lane.b32.xlu0 %v479, 32
  %v482 = vpop.permute.xlu0 %481
  %v484 = vadd.f32 %v474, %v482
  %v485 = vtanh.pop %v484
  %487 = vrot.lane.b32.xlu0 %v485, 64
  %v488 = vpop.permute.xlu0 %487
  %v490 = vmul.f32 %v473, %v488
  %492 = vrot.lane.b32.xlu0 %v490, 32
  %v493 = vpop.permute.xlu0 %492
  %495 = vst.msk [vmem:[#allocation2 + $0x10] sm:$0xff] %vm185, %v493
  %v496 = vsel %vm185, %v493, 0
  %498 = vmatprep.subr.mxu0 0.0
  %499 = vmatpush1.msra.mxu0 %v31
  %500 = vmatprep.subr.mxu0 0.0
  %501 = vmatpush1.msra.mxu0 %v32
  %502 = vmatprep.subr.mxu0 0.0
  %503 = vmatpush1.msra.mxu0 %v33
  %504 = vmatprep.subr.mxu0 0.0
  %505 = vmatpush1.msra.mxu0 %v34
  %506 = vmatprep.subr.mxu0 0.0
  %507 = vmatpush1.msra.mxu0 0.0
  %508 = vmatprep.subr.mxu0 0.0
  %509 = vmatpush1.msra.mxu0 0.0
  %510 = vmatprep.subr.mxu0 0.0
  %511 = vmatpush1.msra.mxu0 0.0
  %512 = vmatprep.subr.mxu0 0.0
  %513 = vmatpush1.msra.mxu0 0.0
  %514 = vmatprep.subr.mxu0 0.0
  %515 = vmatpush1.msra.mxu0 0.0
  %516 = vmatprep.subr.mxu0 0.0
  %517 = vmatpush1.msra.mxu0 0.0
  %518 = vmatprep.subr.mxu0 0.0
  %519 = vmatpush1.msra.mxu0 0.0
  %520 = vmatprep.subr.mxu0 0.0
  %521 = vmatpush1.msra.mxu0 0.0
  %522 = vmatprep.subr.mxu0 0.0
  %523 = vmatpush1.msra.mxu0 0.0
  %524 = vmatprep.subr.mxu0 0.0
  %525 = vmatpush1.msra.mxu0 0.0
  %526 = vmatprep.subr.mxu0 0.0
  %527 = vmatpush1.msra.mxu0 0.0
  %528 = vmatprep.subr.mxu0 0.0
  %529 = vmatpush1.msra.mxu0 0.0
  %530 = vmatprep.subr.mxu0 0.0
  %531 = vmatpush1.msra.mxu0 0.0
  %532 = vmatprep.subr.mxu0 0.0
  %533 = vmatpush1.msra.mxu0 0.0
  %534 = vmatprep.subr.mxu0 0.0
  %535 = vmatpush1.msra.mxu0 0.0
  %536 = vmatprep.subr.mxu0 0.0
  %537 = vmatpush1.msra.mxu0 0.0
  %538 = vmatprep.subr.mxu0 0.0
  %539 = vmatpush1.msra.mxu0 0.0
  %540 = vmatprep.subr.mxu0 0.0
  %541 = vmatpush1.msra.mxu0 0.0
  %542 = vmatprep.subr.mxu0 0.0
  %543 = vmatpush1.msra.mxu0 0.0
  %544 = vmatprep.subr.mxu0 0.0
  %545 = vmatpush1.msra.mxu0 0.0
  %546 = vmatprep.subr.mxu0 0.0
  %547 = vmatpush1.msra.mxu0 0.0
  %548 = vmatprep.subr.mxu0 0.0
  %549 = vmatpush1.msra.mxu0 0.0
  %550 = vmatprep.subr.mxu0 0.0
  %551 = vmatpush1.msra.mxu0 0.0
  %552 = vmatprep.subr.mxu0 0.0
  %553 = vmatpush1.msra.mxu0 0.0
  %554 = vmatprep.subr.mxu0 0.0
  %555 = vmatpush1.msra.mxu0 0.0
  %556 = vmatprep.subr.mxu0 0.0
  %557 = vmatpush1.msra.mxu0 0.0
  %558 = vmatprep.subr.mxu0 0.0
  %559 = vmatpush1.msra.mxu0 0.0
  %560 = vmatprep.subr.mxu0 0.0
  %561 = vmatpush1.msra.mxu0 0.0
  %562 = vmatprep.mubr.f32.mxu0 0.0
  %563 = vmatmul.mubr.f32.gmra.mrb[0].mxu0 %v496
  %v564 = vpop.f32.mrb[0].mxu0
  %v565 = vadd.f32 0.0, %v564
  %v566 = vpop.f32.mrb[0].mxu0
  %567 = vdwg.mxu0
  %v568 = vadd.f32 %v157, %v565
  %v569 = vtanh.pop %v568
  %v570 = vxor.u32 %v568, 2147483648
  %v571 = vmul.f32 %v570, 1.442695
  %v572 = vpow.pop %v571
  %v573 = vadd.f32 %v572, 1.0
  %v574 = vrcp.pop %v573
  %v575 = vmul.f32 1.0, %v574
  %v576 = vsel %vm184, %v569, %v575
  %v577 = vmul.f32 %v576, %v484
  %579 = vrot.lane.b32.xlu0 %v576, 64
  %v580 = vpop.permute.xlu0 %579
  %v582 = vmul.f32 %v576, %v580
  %584 = vrot.lane.b32.xlu0 %v582, 32
  %v585 = vpop.permute.xlu0 %584
  %v587 = vadd.f32 %v577, %v585
  %v588 = vtanh.pop %v587
  %590 = vrot.lane.b32.xlu0 %v588, 64
  %v591 = vpop.permute.xlu0 %590
  %v593 = vmul.f32 %v576, %v591
  %595 = vrot.lane.b32.xlu0 %v593, 32
  %v596 = vpop.permute.xlu0 %595
  %598 = vst.msk [vmem:[#allocation2 + $0x18] sm:$0xff] %vm185, %v596
  %v599 = vsel %vm185, %v596, 0
  %601 = vmatprep.subr.mxu0 0.0
  %602 = vmatpush1.msra.mxu0 %v31
  %603 = vmatprep.subr.mxu0 0.0
  %604 = vmatpush1.msra.mxu0 %v32
  %605 = vmatprep.subr.mxu0 0.0
  %606 = vmatpush1.msra.mxu0 %v33
  %607 = vmatprep.subr.mxu0 0.0
  %608 = vmatpush1.msra.mxu0 %v34
  %609 = vmatprep.subr.mxu0 0.0
  %610 = vmatpush1.msra.mxu0 0.0
  %611 = vmatprep.subr.mxu0 0.0
  %612 = vmatpush1.msra.mxu0 0.0
  %613 = vmatprep.subr.mxu0 0.0
  %614 = vmatpush1.msra.mxu0 0.0
  %615 = vmatprep.subr.mxu0 0.0
  %616 = vmatpush1.msra.mxu0 0.0
  %617 = vmatprep.subr.mxu0 0.0
  %618 = vmatpush1.msra.mxu0 0.0
  %619 = vmatprep.subr.mxu0 0.0
  %620 = vmatpush1.msra.mxu0 0.0
  %621 = vmatprep.subr.mxu0 0.0
  %622 = vmatpush1.msra.mxu0 0.0
  %623 = vmatprep.subr.mxu0 0.0
  %624 = vmatpush1.msra.mxu0 0.0
  %625 = vmatprep.subr.mxu0 0.0
  %626 = vmatpush1.msra.mxu0 0.0
  %627 = vmatprep.subr.mxu0 0.0
  %628 = vmatpush1.msra.mxu0 0.0
  %629 = vmatprep.subr.mxu0 0.0
  %630 = vmatpush1.msra.mxu0 0.0
  %631 = vmatprep.subr.mxu0 0.0
  %632 = vmatpush1.msra.mxu0 0.0
  %633 = vmatprep.subr.mxu0 0.0
  %634 = vmatpush1.msra.mxu0 0.0
  %635 = vmatprep.subr.mxu0 0.0
  %636 = vmatpush1.msra.mxu0 0.0
  %637 = vmatprep.subr.mxu0 0.0
  %638 = vmatpush1.msra.mxu0 0.0
  %639 = vmatprep.subr.mxu0 0.0
  %640 = vmatpush1.msra.mxu0 0.0
  %641 = vmatprep.subr.mxu0 0.0
  %642 = vmatpush1.msra.mxu0 0.0
  %643 = vmatprep.subr.mxu0 0.0
  %644 = vmatpush1.msra.mxu0 0.0
  %645 = vmatprep.subr.mxu0 0.0
  %646 = vmatpush1.msra.mxu0 0.0
  %647 = vmatprep.subr.mxu0 0.0
  %648 = vmatpush1.msra.mxu0 0.0
  %649 = vmatprep.subr.mxu0 0.0
  %650 = vmatpush1.msra.mxu0 0.0
  %651 = vmatprep.subr.mxu0 0.0
  %652 = vmatpush1.msra.mxu0 0.0
  %653 = vmatprep.subr.mxu0 0.0
  %654 = vmatpush1.msra.mxu0 0.0
  %655 = vmatprep.subr.mxu0 0.0
  %656 = vmatpush1.msra.mxu0 0.0
  %657 = vmatprep.subr.mxu0 0.0
  %658 = vmatpush1.msra.mxu0 0.0
  %659 = vmatprep.subr.mxu0 0.0
  %660 = vmatpush1.msra.mxu0 0.0
  %661 = vmatprep.subr.mxu0 0.0
  %662 = vmatpush1.msra.mxu0 0.0
  %663 = vmatprep.subr.mxu0 0.0
  %664 = vmatpush1.msra.mxu0 0.0
  %665 = vmatprep.mubr.f32.mxu0 0.0
  %666 = vmatmul.mubr.f32.gmra.mrb[0].mxu0 %v599
  %v667 = vpop.f32.mrb[0].mxu0
  %v668 = vadd.f32 0.0, %v667
  %v669 = vpop.f32.mrb[0].mxu0
  %670 = vdwg.mxu0
  %v671 = vadd.f32 %v162, %v668
  %v672 = vtanh.pop %v671
  %v673 = vxor.u32 %v671, 2147483648
  %v674 = vmul.f32 %v673, 1.442695
  %v675 = vpow.pop %v674
  %v676 = vadd.f32 %v675, 1.0
  %v677 = vrcp.pop %v676
  %v678 = vmul.f32 1.0, %v677
  %v679 = vsel %vm184, %v672, %v678
  %v680 = vmul.f32 %v679, %v587
  %682 = vrot.lane.b32.xlu0 %v679, 64
  %v683 = vpop.permute.xlu0 %682
  %v685 = vmul.f32 %v679, %v683
  %687 = vrot.lane.b32.xlu0 %v685, 32
  %v688 = vpop.permute.xlu0 %687
  %v690 = vadd.f32 %v680, %v688
  %v691 = vtanh.pop %v690
  %693 = vrot.lane.b32.xlu0 %v691, 64
  %v694 = vpop.permute.xlu0 %693
  %v696 = vmul.f32 %v679, %v694
  %698 = vrot.lane.b32.xlu0 %v696, 32
  %v699 = vpop.permute.xlu0 %698
  %701 = vst.msk [vmem:[#allocation2 + $0x20] sm:$0xff] %vm185, %v699
  %v702 = vsel %vm185, %v699, 0
  %704 = vmatprep.subr.mxu0 0.0
  %705 = vmatpush1.msra.mxu0 %v31
  %706 = vmatprep.subr.mxu0 0.0
  %707 = vmatpush1.msra.mxu0 %v32
  %708 = vmatprep.subr.mxu0 0.0
  %709 = vmatpush1.msra.mxu0 %v33
  %710 = vmatprep.subr.mxu0 0.0
  %711 = vmatpush1.msra.mxu0 %v34
  %712 = vmatprep.subr.mxu0 0.0
  %713 = vmatpush1.msra.mxu0 0.0
  %714 = vmatprep.subr.mxu0 0.0
  %715 = vmatpush1.msra.mxu0 0.0
  %716 = vmatprep.subr.mxu0 0.0
  %717 = vmatpush1.msra.mxu0 0.0
  %718 = vmatprep.subr.mxu0 0.0
  %719 = vmatpush1.msra.mxu0 0.0
  %720 = vmatprep.subr.mxu0 0.0
  %721 = vmatpush1.msra.mxu0 0.0
  %722 = vmatprep.subr.mxu0 0.0
  %723 = vmatpush1.msra.mxu0 0.0
  %724 = vmatprep.subr.mxu0 0.0
  %725 = vmatpush1.msra.mxu0 0.0
  %726 = vmatprep.subr.mxu0 0.0
  %727 = vmatpush1.msra.mxu0 0.0
  %728 = vmatprep.subr.mxu0 0.0
  %729 = vmatpush1.msra.mxu0 0.0
  %730 = vmatprep.subr.mxu0 0.0
  %731 = vmatpush1.msra.mxu0 0.0
  %732 = vmatprep.subr.mxu0 0.0
  %733 = vmatpush1.msra.mxu0 0.0
  %734 = vmatprep.subr.mxu0 0.0
  %735 = vmatpush1.msra.mxu0 0.0
  %736 = vmatprep.subr.mxu0 0.0
  %737 = vmatpush1.msra.mxu0 0.0
  %738 = vmatprep.subr.mxu0 0.0
  %739 = vmatpush1.msra.mxu0 0.0
  %740 = vmatprep.subr.mxu0 0.0
  %741 = vmatpush1.msra.mxu0 0.0
  %742 = vmatprep.subr.mxu0 0.0
  %743 = vmatpush1.msra.mxu0 0.0
  %744 = vmatprep.subr.mxu0 0.0
  %745 = vmatpush1.msra.mxu0 0.0
  %746 = vmatprep.subr.mxu0 0.0
  %747 = vmatpush1.msra.mxu0 0.0
  %748 = vmatprep.subr.mxu0 0.0
  %749 = vmatpush1.msra.mxu0 0.0
  %750 = vmatprep.subr.mxu0 0.0
  %751 = vmatpush1.msra.mxu0 0.0
  %752 = vmatprep.subr.mxu0 0.0
  %753 = vmatpush1.msra.mxu0 0.0
  %754 = vmatprep.subr.mxu0 0.0
  %755 = vmatpush1.msra.mxu0 0.0
  %756 = vmatprep.subr.mxu0 0.0
  %757 = vmatpush1.msra.mxu0 0.0
  %758 = vmatprep.subr.mxu0 0.0
  %759 = vmatpush1.msra.mxu0 0.0
  %760 = vmatprep.subr.mxu0 0.0
  %761 = vmatpush1.msra.mxu0 0.0
  %762 = vmatprep.subr.mxu0 0.0
  %763 = vmatpush1.msra.mxu0 0.0
  %764 = vmatprep.subr.mxu0 0.0
  %765 = vmatpush1.msra.mxu0 0.0
  %766 = vmatprep.subr.mxu0 0.0
  %767 = vmatpush1.msra.mxu0 0.0
  %768 = vmatprep.mubr.f32.mxu0 0.0
  %769 = vmatmul.mubr.f32.gmra.mrb[0].mxu0 %v702
  %v770 = vpop.f32.mrb[0].mxu0
  %v771 = vadd.f32 0.0, %v770
  %v772 = vpop.f32.mrb[0].mxu0
  %773 = vdwg.mxu0
  %v774 = vadd.f32 %v167, %v771
  %v775 = vtanh.pop %v774
  %v776 = vxor.u32 %v774, 2147483648
  %v777 = vmul.f32 %v776, 1.442695
  %v778 = vpow.pop %v777
  %v779 = vadd.f32 %v778, 1.0
  %v780 = vrcp.pop %v779
  %v781 = vmul.f32 1.0, %v780
  %v782 = vsel %vm184, %v775, %v781
  %v783 = vmul.f32 %v782, %v690
  %785 = vrot.lane.b32.xlu0 %v782, 64
  %v786 = vpop.permute.xlu0 %785
  %v788 = vmul.f32 %v782, %v786
  %790 = vrot.lane.b32.xlu0 %v788, 32
  %v791 = vpop.permute.xlu0 %790
  %v793 = vadd.f32 %v783, %v791
  %v794 = vtanh.pop %v793
  %796 = vrot.lane.b32.xlu0 %v794, 64
  %v797 = vpop.permute.xlu0 %796
  %v799 = vmul.f32 %v782, %v797
  %801 = vrot.lane.b32.xlu0 %v799, 32
  %v802 = vpop.permute.xlu0 %801
  %804 = vst.msk [vmem:[#allocation2 + $0x28] sm:$0xff] %vm185, %v802
  %v805 = vsel %vm185, %v802, 0
  %807 = vmatprep.subr.mxu0 0.0
  %808 = vmatpush1.msra.mxu0 %v31
  %809 = vmatprep.subr.mxu0 0.0
  %810 = vmatpush1.msra.mxu0 %v32
  %811 = vmatprep.subr.mxu0 0.0
  %812 = vmatpush1.msra.mxu0 %v33
  %813 = vmatprep.subr.mxu0 0.0
  %814 = vmatpush1.msra.mxu0 %v34
  %815 = vmatprep.subr.mxu0 0.0
  %816 = vmatpush1.msra.mxu0 0.0
  %817 = vmatprep.subr.mxu0 0.0
  %818 = vmatpush1.msra.mxu0 0.0
  %819 = vmatprep.subr.mxu0 0.0
  %820 = vmatpush1.msra.mxu0 0.0
  %821 = vmatprep.subr.mxu0 0.0
  %822 = vmatpush1.msra.mxu0 0.0
  %823 = vmatprep.subr.mxu0 0.0
  %824 = vmatpush1.msra.mxu0 0.0
  %825 = vmatprep.subr.mxu0 0.0
  %826 = vmatpush1.msra.mxu0 0.0
  %827 = vmatprep.subr.mxu0 0.0
  %828 = vmatpush1.msra.mxu0 0.0
  %829 = vmatprep.subr.mxu0 0.0
  %830 = vmatpush1.msra.mxu0 0.0
  %831 = vmatprep.subr.mxu0 0.0
  %832 = vmatpush1.msra.mxu0 0.0
  %833 = vmatprep.subr.mxu0 0.0
  %834 = vmatpush1.msra.mxu0 0.0
  %835 = vmatprep.subr.mxu0 0.0
  %836 = vmatpush1.msra.mxu0 0.0
  %837 = vmatprep.subr.mxu0 0.0
  %838 = vmatpush1.msra.mxu0 0.0
  %839 = vmatprep.subr.mxu0 0.0
  %840 = vmatpush1.msra.mxu0 0.0
  %841 = vmatprep.subr.mxu0 0.0
  %842 = vmatpush1.msra.mxu0 0.0
  %843 = vmatprep.subr.mxu0 0.0
  %844 = vmatpush1.msra.mxu0 0.0
  %845 = vmatprep.subr.mxu0 0.0
  %846 = vmatpush1.msra.mxu0 0.0
  %847 = vmatprep.subr.mxu0 0.0
  %848 = vmatpush1.msra.mxu0 0.0
  %849 = vmatprep.subr.mxu0 0.0
  %850 = vmatpush1.msra.mxu0 0.0
  %851 = vmatprep.subr.mxu0 0.0
  %852 = vmatpush1.msra.mxu0 0.0
  %853 = vmatprep.subr.mxu0 0.0
  %854 = vmatpush1.msra.mxu0 0.0
  %855 = vmatprep.subr.mxu0 0.0
  %856 = vmatpush1.msra.mxu0 0.0
  %857 = vmatprep.subr.mxu0 0.0
  %858 = vmatpush1.msra.mxu0 0.0
  %859 = vmatprep.subr.mxu0 0.0
  %860 = vmatpush1.msra.mxu0 0.0
  %861 = vmatprep.subr.mxu0 0.0
  %862 = vmatpush1.msra.mxu0 0.0
  %863 = vmatprep.subr.mxu0 0.0
  %864 = vmatpush1.msra.mxu0 0.0
  %865 = vmatprep.subr.mxu0 0.0
  %866 = vmatpush1.msra.mxu0 0.0
  %867 = vmatprep.subr.mxu0 0.0
  %868 = vmatpush1.msra.mxu0 0.0
  %869 = vmatprep.subr.mxu0 0.0
  %870 = vmatpush1.msra.mxu0 0.0
  %871 = vmatprep.mubr.f32.mxu0 0.0
  %872 = vmatmul.mubr.f32.gmra.mrb[0].mxu0 %v805
  %v873 = vpop.f32.mrb[0].mxu0
  %v874 = vadd.f32 0.0, %v873
  %v875 = vpop.f32.mrb[0].mxu0
  %876 = vdwg.mxu0
  %v877 = vadd.f32 %v172, %v874
  %v878 = vtanh.pop %v877
  %v879 = vxor.u32 %v877, 2147483648
  %v880 = vmul.f32 %v879, 1.442695
  %v881 = vpow.pop %v880
  %v882 = vadd.f32 %v881, 1.0
  %v883 = vrcp.pop %v882
  %v884 = vmul.f32 1.0, %v883
  %v885 = vsel %vm184, %v878, %v884
  %v886 = vmul.f32 %v885, %v793
  %888 = vrot.lane.b32.xlu0 %v885, 64
  %v889 = vpop.permute.xlu0 %888
  %v891 = vmul.f32 %v885, %v889
  %893 = vrot.lane.b32.xlu0 %v891, 32
  %v894 = vpop.permute.xlu0 %893
  %v896 = vadd.f32 %v886, %v894
  %v897 = vtanh.pop %v896
  %899 = vrot.lane.b32.xlu0 %v897, 64
  %v900 = vpop.permute.xlu0 %899
  %v902 = vmul.f32 %v885, %v900
  %904 = vrot.lane.b32.xlu0 %v902, 32
  %v905 = vpop.permute.xlu0 %904
  %907 = vst.msk [vmem:[#allocation2 + $0x30] sm:$0xff] %vm185, %v905
  %v908 = vsel %vm185, %v905, 0
  %910 = vmatprep.subr.mxu0 0.0
  %911 = vmatpush1.msra.mxu0 %v31
  %912 = vmatprep.subr.mxu0 0.0
  %913 = vmatpush1.msra.mxu0 %v32
  %914 = vmatprep.subr.mxu0 0.0
  %915 = vmatpush1.msra.mxu0 %v33
  %916 = vmatprep.subr.mxu0 0.0
  %917 = vmatpush1.msra.mxu0 %v34
  %918 = vmatprep.subr.mxu0 0.0
  %919 = vmatpush1.msra.mxu0 0.0
  %920 = vmatprep.subr.mxu0 0.0
  %921 = vmatpush1.msra.mxu0 0.0
  %922 = vmatprep.subr.mxu0 0.0
  %923 = vmatpush1.msra.mxu0 0.0
  %924 = vmatprep.subr.mxu0 0.0
  %925 = vmatpush1.msra.mxu0 0.0
  %926 = vmatprep.subr.mxu0 0.0
  %927 = vmatpush1.msra.mxu0 0.0
  %928 = vmatprep.subr.mxu0 0.0
  %929 = vmatpush1.msra.mxu0 0.0
  %930 = vmatprep.subr.mxu0 0.0
  %931 = vmatpush1.msra.mxu0 0.0
  %932 = vmatprep.subr.mxu0 0.0
  %933 = vmatpush1.msra.mxu0 0.0
  %934 = vmatprep.subr.mxu0 0.0
  %935 = vmatpush1.msra.mxu0 0.0
  %936 = vmatprep.subr.mxu0 0.0
  %937 = vmatpush1.msra.mxu0 0.0
  %938 = vmatprep.subr.mxu0 0.0
  %939 = vmatpush1.msra.mxu0 0.0
  %940 = vmatprep.subr.mxu0 0.0
  %941 = vmatpush1.msra.mxu0 0.0
  %942 = vmatprep.subr.mxu0 0.0
  %943 = vmatpush1.msra.mxu0 0.0
  %944 = vmatprep.subr.mxu0 0.0
  %945 = vmatpush1.msra.mxu0 0.0
  %946 = vmatprep.subr.mxu0 0.0
  %947 = vmatpush1.msra.mxu0 0.0
  %948 = vmatprep.subr.mxu0 0.0
  %949 = vmatpush1.msra.mxu0 0.0
  %950 = vmatprep.subr.mxu0 0.0
  %951 = vmatpush1.msra.mxu0 0.0
  %952 = vmatprep.subr.mxu0 0.0
  %953 = vmatpush1.msra.mxu0 0.0
  %954 = vmatprep.subr.mxu0 0.0
  %955 = vmatpush1.msra.mxu0 0.0
  %956 = vmatprep.subr.mxu0 0.0
  %957 = vmatpush1.msra.mxu0 0.0
  %958 = vmatprep.subr.mxu0 0.0
  %959 = vmatpush1.msra.mxu0 0.0
  %960 = vmatprep.subr.mxu0 0.0
  %961 = vmatpush1.msra.mxu0 0.0
  %962 = vmatprep.subr.mxu0 0.0
  %963 = vmatpush1.msra.mxu0 0.0
  %964 = vmatprep.subr.mxu0 0.0
  %965 = vmatpush1.msra.mxu0 0.0
  %966 = vmatprep.subr.mxu0 0.0
  %967 = vmatpush1.msra.mxu0 0.0
  %968 = vmatprep.subr.mxu0 0.0
  %969 = vmatpush1.msra.mxu0 0.0
  %970 = vmatprep.subr.mxu0 0.0
  %971 = vmatpush1.msra.mxu0 0.0
  %972 = vmatprep.subr.mxu0 0.0
  %973 = vmatpush1.msra.mxu0 0.0
  %974 = vmatprep.mubr.f32.mxu0 0.0
  %975 = vmatmul.mubr.f32.gmra.mrb[0].mxu0 %v908
  %v976 = vpop.f32.mrb[0].mxu0
  %v977 = vadd.f32 0.0, %v976
  %v978 = vpop.f32.mrb[0].mxu0
  %979 = vdwg.mxu0
  %v980 = vadd.f32 %v177, %v977
  %v981 = vtanh.pop %v980
  %v982 = vxor.u32 %v980, 2147483648
  %v983 = vmul.f32 %v982, 1.442695
  %v984 = vpow.pop %v983
  %v985 = vadd.f32 %v984, 1.0
  %v986 = vrcp.pop %v985
  %v987 = vmul.f32 1.0, %v986
  %v988 = vsel %vm184, %v981, %v987
  %v989 = vmul.f32 %v988, %v896
  %991 = vrot.lane.b32.xlu0 %v988, 64
  %v992 = vpop.permute.xlu0 %991
  %v994 = vmul.f32 %v988, %v992
  %996 = vrot.lane.b32.xlu0 %v994, 32
  %v997 = vpop.permute.xlu0 %996
  %v999 = vadd.f32 %v989, %v997
  %v1000 = vtanh.pop %v999
  %1002 = vrot.lane.b32.xlu0 %v1000, 64
  %v1003 = vpop.permute.xlu0 %1002
  %v1005 = vmul.f32 %v988, %v1003
  %1007 = vrot.lane.b32.xlu0 %v1005, 32
  %v1008 = vpop.permute.xlu0 %1007
  %1010 = vst.msk [vmem:[#allocation2 + $0x38] sm:$0xff] %vm185, %v1008
  %v1011 = vld [vmem:[#allocation2] sm:$0xff]
  %v1012 = vld [vmem:[#allocation2 + $0x8] sm:$0xff]
  %v1013 = vld [vmem:[#allocation2 + $0x10] sm:$0xff]
  %v1014 = vld [vmem:[#allocation2 + $0x18] sm:$0xff]
  %v1015 = vld [vmem:[#allocation2 + $0x20] sm:$0xff]
  %v1016 = vld [vmem:[#allocation2 + $0x28] sm:$0xff]
  %v1017 = vld [vmem:[#allocation2 + $0x30] sm:$0xff]
  %v1018 = vld [vmem:[#allocation2 + $0x38] sm:$0xff]
  %v1019 = vld [vmem:[%s4] sm:$0xff]
  %v1020 = vld [vmem:[%s4 + $0x8] sm:$0xff]
  %v1021 = vld [vmem:[%s4 + $0x10] sm:$0xff]
  %v1022 = vld [vmem:[%s4 + $0x18] sm:$0xff]
  %v1023 = vld [vmem:[%s5] sm:$0x1]
  %v1025 = vlaneseq
  %v1026 = vshrl.u32 %v1025, 7
  %v1027 = vsub.s32 0, %v1026
  %v1028 = vrot.slane %v1023, %v1027
  %v1031 = vsel %vm185, %v1011, 0
  %v1034 = vsel %vm185, %v1012, 0
  %v1037 = vsel %vm185, %v1013, 0
  %v1040 = vsel %vm185, %v1014, 0
  %v1043 = vsel %vm185, %v1015, 0
  %v1046 = vsel %vm185, %v1016, 0
  %v1049 = vsel %vm185, %v1017, 0
  %v1052 = vsel %vm185, %v1018, 0
  %1054 = vmatprep.subr.mxu0 0.0
  %1055 = vmatpush1.msra.mxu0 %v1019
  %1056 = vmatprep.subr.mxu0 0.0
  %1057 = vmatpush1.msra.mxu0 %v1020
  %1058 = vmatprep.subr.mxu0 0.0
  %1059 = vmatpush1.msra.mxu0 %v1021
  %1060 = vmatprep.subr.mxu0 0.0
  %1061 = vmatpush1.msra.mxu0 %v1022
  %1062 = vmatprep.subr.mxu0 0.0
  %1063 = vmatpush1.msra.mxu0 0.0
  %1064 = vmatprep.subr.mxu0 0.0
  %1065 = vmatpush1.msra.mxu0 0.0
  %1066 = vmatprep.subr.mxu0 0.0
  %1067 = vmatpush1.msra.mxu0 0.0
  %1068 = vmatprep.subr.mxu0 0.0
  %1069 = vmatpush1.msra.mxu0 0.0
  %1070 = vmatprep.subr.mxu0 0.0
  %1071 = vmatpush1.msra.mxu0 0.0
  %1072 = vmatprep.subr.mxu0 0.0
  %1073 = vmatpush1.msra.mxu0 0.0
  %1074 = vmatprep.subr.mxu0 0.0
  %1075 = vmatpush1.msra.mxu0 0.0
  %1076 = vmatprep.subr.mxu0 0.0
  %1077 = vmatpush1.msra.mxu0 0.0
  %1078 = vmatprep.subr.mxu0 0.0
  %1079 = vmatpush1.msra.mxu0 0.0
  %1080 = vmatprep.subr.mxu0 0.0
  %1081 = vmatpush1.msra.mxu0 0.0
  %1082 = vmatprep.subr.mxu0 0.0
  %1083 = vmatpush1.msra.mxu0 0.0
  %1084 = vmatprep.subr.mxu0 0.0
  %1085 = vmatpush1.msra.mxu0 0.0
  %1086 = vmatprep.subr.mxu0 0.0
  %1087 = vmatpush1.msra.mxu0 0.0
  %1088 = vmatprep.subr.mxu0 0.0
  %1089 = vmatpush1.msra.mxu0 0.0
  %1090 = vmatprep.subr.mxu0 0.0
  %1091 = vmatpush1.msra.mxu0 0.0
  %1092 = vmatprep.subr.mxu0 0.0
  %1093 = vmatpush1.msra.mxu0 0.0
  %1094 = vmatprep.subr.mxu0 0.0
  %1095 = vmatpush1.msra.mxu0 0.0
  %1096 = vmatprep.subr.mxu0 0.0
  %1097 = vmatpush1.msra.mxu0 0.0
  %1098 = vmatprep.subr.mxu0 0.0
  %1099 = vmatpush1.msra.mxu0 0.0
  %1100 = vmatprep.subr.mxu0 0.0
  %1101 = vmatpush1.msra.mxu0 0.0
  %1102 = vmatprep.subr.mxu0 0.0
  %1103 = vmatpush1.msra.mxu0 0.0
  %1104 = vmatprep.subr.mxu0 0.0
  %1105 = vmatpush1.msra.mxu0 0.0
  %1106 = vmatprep.subr.mxu0 0.0
  %1107 = vmatpush1.msra.mxu0 0.0
  %1108 = vmatprep.subr.mxu0 0.0
  %1109 = vmatpush1.msra.mxu0 0.0
  %1110 = vmatprep.subr.mxu0 0.0
  %1111 = vmatpush1.msra.mxu0 0.0
  %1112 = vmatprep.subr.mxu0 0.0
  %1113 = vmatpush1.msra.mxu0 0.0
  %1114 = vmatprep.subr.mxu0 0.0
  %1115 = vmatpush1.msra.mxu0 0.0
  %1116 = vmatprep.subr.mxu0 0.0
  %1117 = vmatpush1.msra.mxu0 0.0
  %1118 = vmatprep.mubr.f32.mxu0 0.0
  %1119 = vmatmul.mubr.f32.gmra.mrb[0].mxu0 %v1031
  %v1120 = vpop.f32.mrb[0].mxu0
  %v1121 = vadd.f32 %v1028, %v1120
  %v1122 = vpop.f32.mrb[0].mxu0
  %1123 = vmatprep.mubr.f32.mxu0 0.0
  %1124 = vmatmul.mubr.f32.gmra.mrb[0].mxu0 %v1034
  %v1125 = vpop.f32.mrb[0].mxu0
  %v1126 = vadd.f32 %v1028, %v1125
  %v1127 = vpop.f32.mrb[0].mxu0
  %1128 = vmatprep.mubr.f32.mxu0 0.0
  %1129 = vmatmul.mubr.f32.gmra.mrb[0].mxu0 %v1037
  %v1130 = vpop.f32.mrb[0].mxu0
  %v1131 = vadd.f32 %v1028, %v1130
  %v1132 = vpop.f32.mrb[0].mxu0
  %1133 = vmatprep.mubr.f32.mxu0 0.0
  %1134 = vmatmul.mubr.f32.gmra.mrb[0].mxu0 %v1040
  %v1135 = vpop.f32.mrb[0].mxu0
  %v1136 = vadd.f32 %v1028, %v1135
  %v1137 = vpop.f32.mrb[0].mxu0
  %1138 = vmatprep.mubr.f32.mxu0 0.0
  %1139 = vmatmul.mubr.f32.gmra.mrb[0].mxu0 %v1043
  %v1140 = vpop.f32.mrb[0].mxu0
  %v1141 = vadd.f32 %v1028, %v1140
  %v1142 = vpop.f32.mrb[0].mxu0
  %1143 = vmatprep.mubr.f32.mxu0 0.0
  %1144 = vmatmul.mubr.f32.gmra.mrb[0].mxu0 %v1046
  %v1145 = vpop.f32.mrb[0].mxu0
  %v1146 = vadd.f32 %v1028, %v1145
  %v1147 = vpop.f32.mrb[0].mxu0
  %1148 = vmatprep.mubr.f32.mxu0 0.0
  %1149 = vmatmul.mubr.f32.gmra.mrb[0].mxu0 %v1049
  %v1150 = vpop.f32.mrb[0].mxu0
  %v1151 = vadd.f32 %v1028, %v1150
  %v1152 = vpop.f32.mrb[0].mxu0
  %1153 = vmatprep.mubr.f32.mxu0 0.0
  %1154 = vmatmul.mubr.f32.gmra.mrb[0].mxu0 %v1052
  %v1155 = vpop.f32.mrb[0].mxu0
  %v1156 = vadd.f32 %v1028, %v1155
  %v1157 = vpop.f32.mrb[0].mxu0
  %1158 = vdwg.mxu0
  %v1159 = vmax.f32 %v1121, 0.0
  %v1160 = vmax.f32 %v1126, 0.0
  %v1161 = vmax.f32 %v1131, 0.0
  %v1162 = vmax.f32 %v1136, 0.0
  %v1163 = vmax.f32 %v1141, 0.0
  %v1164 = vmax.f32 %v1146, 0.0
  %v1165 = vmax.f32 %v1151, 0.0
  %v1166 = vmax.f32 %v1156, 0.0
  %v1167 = vld [vmem:[%s6] sm:$0xff]
  %v1168 = vld [vmem:[%s6 + $0x8] sm:$0xff]
  %v1169 = vld [vmem:[%s6 + $0x10] sm:$0xff]
  %v1170 = vld [vmem:[%s6 + $0x18] sm:$0xff]
  %v1171 = vld [vmem:[%s7] sm:$0x1]
  %v1173 = vlaneseq
  %v1174 = vshrl.u32 %v1173, 7
  %v1175 = vsub.s32 0, %v1174
  %v1176 = vrot.slane %v1171, %v1175
  %v1179 = vsel %vm185, %v1159, 0
  %v1182 = vsel %vm185, %v1160, 0
  %v1185 = vsel %vm185, %v1161, 0
  %v1188 = vsel %vm185, %v1162, 0
  %v1191 = vsel %vm185, %v1163, 0
  %v1194 = vsel %vm185, %v1164, 0
  %v1197 = vsel %vm185, %v1165, 0
  %v1200 = vsel %vm185, %v1166, 0
  %1202 = vmatprep.subr.mxu0 0.0
  %1203 = vmatpush1.msra.mxu0 %v1167
  %1204 = vmatprep.subr.mxu0 0.0
  %1205 = vmatpush1.msra.mxu0 %v1168
  %1206 = vmatprep.subr.mxu0 0.0
  %1207 = vmatpush1.msra.mxu0 %v1169
  %1208 = vmatprep.subr.mxu0 0.0
  %1209 = vmatpush1.msra.mxu0 %v1170
  %1210 = vmatprep.subr.mxu0 0.0
  %1211 = vmatpush1.msra.mxu0 0.0
  %1212 = vmatprep.subr.mxu0 0.0
  %1213 = vmatpush1.msra.mxu0 0.0
  %1214 = vmatprep.subr.mxu0 0.0
  %1215 = vmatpush1.msra.mxu0 0.0
  %1216 = vmatprep.subr.mxu0 0.0
  %1217 = vmatpush1.msra.mxu0 0.0
  %1218 = vmatprep.subr.mxu0 0.0
  %1219 = vmatpush1.msra.mxu0 0.0
  %1220 = vmatprep.subr.mxu0 0.0
  %1221 = vmatpush1.msra.mxu0 0.0
  %1222 = vmatprep.subr.mxu0 0.0
  %1223 = vmatpush1.msra.mxu0 0.0
  %1224 = vmatprep.subr.mxu0 0.0
  %1225 = vmatpush1.msra.mxu0 0.0
  %1226 = vmatprep.subr.mxu0 0.0
  %1227 = vmatpush1.msra.mxu0 0.0
  %1228 = vmatprep.subr.mxu0 0.0
  %1229 = vmatpush1.msra.mxu0 0.0
  %1230 = vmatprep.subr.mxu0 0.0
  %1231 = vmatpush1.msra.mxu0 0.0
  %1232 = vmatprep.subr.mxu0 0.0
  %1233 = vmatpush1.msra.mxu0 0.0
  %1234 = vmatprep.subr.mxu0 0.0
  %1235 = vmatpush1.msra.mxu0 0.0
  %1236 = vmatprep.subr.mxu0 0.0
  %1237 = vmatpush1.msra.mxu0 0.0
  %1238 = vmatprep.subr.mxu0 0.0
  %1239 = vmatpush1.msra.mxu0 0.0
  %1240 = vmatprep.subr.mxu0 0.0
  %1241 = vmatpush1.msra.mxu0 0.0
  %1242 = vmatprep.subr.mxu0 0.0
  %1243 = vmatpush1.msra.mxu0 0.0
  %1244 = vmatprep.subr.mxu0 0.0
  %1245 = vmatpush1.msra.mxu0 0.0
  %1246 = vmatprep.subr.mxu0 0.0
  %1247 = vmatpush1.msra.mxu0 0.0
  %1248 = vmatprep.subr.mxu0 0.0
  %1249 = vmatpush1.msra.mxu0 0.0
  %1250 = vmatprep.subr.mxu0 0.0
  %1251 = vmatpush1.msra.mxu0 0.0
  %1252 = vmatprep.subr.mxu0 0.0
  %1253 = vmatpush1.msra.mxu0 0.0
  %1254 = vmatprep.subr.mxu0 0.0
  %1255 = vmatpush1.msra.mxu0 0.0
  %1256 = vmatprep.subr.mxu0 0.0
  %1257 = vmatpush1.msra.mxu0 0.0
  %1258 = vmatprep.subr.mxu0 0.0
  %1259 = vmatpush1.msra.mxu0 0.0
  %1260 = vmatprep.subr.mxu0 0.0
  %1261 = vmatpush1.msra.mxu0 0.0
  %1262 = vmatprep.subr.mxu0 0.0
  %1263 = vmatpush1.msra.mxu0 0.0
  %1264 = vmatprep.subr.mxu0 0.0
  %1265 = vmatpush1.msra.mxu0 0.0
  %1266 = vmatprep.mubr.f32.mxu0 0.0
  %1267 = vmatmul.mubr.f32.gmra.mrb[0].mxu0 %v1179
  %v1268 = vpop.f32.mrb[0].mxu0
  %v1269 = vadd.f32 %v1176, %v1268
  %v1270 = vpop.f32.mrb[0].mxu0
  %1271 = vmatprep.mubr.f32.mxu0 0.0
  %1272 = vmatmul.mubr.f32.gmra.mrb[0].mxu0 %v1182
  %v1273 = vpop.f32.mrb[0].mxu0
  %v1274 = vadd.f32 %v1176, %v1273
  %v1275 = vpop.f32.mrb[0].mxu0
  %1276 = vmatprep.mubr.f32.mxu0 0.0
  %1277 = vmatmul.mubr.f32.gmra.mrb[0].mxu0 %v1185
  %v1278 = vpop.f32.mrb[0].mxu0
  %v1279 = vadd.f32 %v1176, %v1278
  %v1280 = vpop.f32.mrb[0].mxu0
  %1281 = vmatprep.mubr.f32.mxu0 0.0
  %1282 = vmatmul.mubr.f32.gmra.mrb[0].mxu0 %v1188
  %v1283 = vpop.f32.mrb[0].mxu0
  %v1284 = vadd.f32 %v1176, %v1283
  %v1285 = vpop.f32.mrb[0].mxu0
  %1286 = vmatprep.mubr.f32.mxu0 0.0
  %1287 = vmatmul.mubr.f32.gmra.mrb[0].mxu0 %v1191
  %v1288 = vpop.f32.mrb[0].mxu0
  %v1289 = vadd.f32 %v1176, %v1288
  %v1290 = vpop.f32.mrb[0].mxu0
  %1291 = vmatprep.mubr.f32.mxu0 0.0
  %1292 = vmatmul.mubr.f32.gmra.mrb[0].mxu0 %v1194
  %v1293 = vpop.f32.mrb[0].mxu0
  %v1294 = vadd.f32 %v1176, %v1293
  %v1295 = vpop.f32.mrb[0].mxu0
  %1296 = vmatprep.mubr.f32.mxu0 0.0
  %1297 = vmatmul.mubr.f32.gmra.mrb[0].mxu0 %v1197
  %v1298 = vpop.f32.mrb[0].mxu0
  %v1299 = vadd.f32 %v1176, %v1298
  %v1300 = vpop.f32.mrb[0].mxu0
  %1301 = vmatprep.mubr.f32.mxu0 0.0
  %1302 = vmatmul.mubr.f32.gmra.mrb[0].mxu0 %v1200
  %v1303 = vpop.f32.mrb[0].mxu0
  %v1304 = vadd.f32 %v1176, %v1303
  %v1305 = vpop.f32.mrb[0].mxu0
  %1306 = vdwg.mxu0
  %1307 = vst [vmem:[%s8] sm:$0xff] %v1269
  %1308 = vst [vmem:[%s8 + $0x8] sm:$0xff] %v1274
  %1309 = vst [vmem:[%s8 + $0x10] sm:$0xff] %v1279
  %1310 = vst [vmem:[%s8 + $0x18] sm:$0xff] %v1284
  %1311 = vst [vmem:[%s8 + $0x20] sm:$0xff] %v1289
  %1312 = vst [vmem:[%s8 + $0x28] sm:$0xff] %v1294
  %1313 = vst [vmem:[%s8 + $0x30] sm:$0xff] %v1299
  %1314 = vst [vmem:[%s8 + $0x38] sm:$0xff] %v1304
  // Predicated region
  $region34: #{configurable_network_forward.1} parent=0 // pred_check
    _
  $region35: #{configurable_network_forward.1} parent=0 // pred_check_branch
    %1316 = sbr.rel (0) target = $region37
  $region36: #{configurable_network_forward.1} parent=0 // pred_region
    _
  $region37: #{configurable_network_forward.1} parent=0 // pred_fallthru
    _
  // Predicated region
  $region38: #{configurable_network_forward.1} parent=0 // pred_check
    _
  $region39: #{configurable_network_forward.1} parent=0 // pred_check_branch
    %1318 = sbr.rel (0) target = $region41
  $region40: #{configurable_network_forward.1} parent=0 // pred_region
    _
  $region41: #{configurable_network_forward.1} parent=0 // pred_fallthru
    _

</llo_original>
